<compile_context>
chip_gen: v7x
topology: tpu7x:2x2x1
jax: 0.10.0
libtpu: 0.0.40
codegen_flags: <defaults>
</compile_context>

<pallas_src>
import jax
import jax.numpy as jnp
from jax.experimental import pallas as pl
from jax.experimental.pallas import tpu as pltpu

INPUT_DIM = 4
LATENT = 2
HIDDEN = 32
BN_EPS = 1e-5
OUT_PACK = 8     # packed in/out lanes: in [qp(2)|feat(2)|eps(2)|pad(2)], out [z(2)|x_rec(2)|sdf(1)|pad(3)]
W_LANES = 128


def _rows(d_in):  # rows reserved per weight in the packed slab
    return -(-d_in // 8) * 8


# static row offsets into the packed weight slab
OFF_E1 = 0
OFF_E2 = OFF_E1 + _rows(INPUT_DIM - 2)   # 8
OFF_E3 = OFF_E2 + _rows(HIDDEN)          # 40
OFF_MV = OFF_E3 + _rows(2 * HIDDEN)      # 104
OFF_F1 = OFF_MV + _rows(HIDDEN)          # 136
OFF_F2 = OFF_F1 + _rows(2 * LATENT)      # 144
OFF_F3 = OFF_F2 + _rows(2 * HIDDEN)      # 208
OFF_F4 = OFF_F3 + _rows(4 * HIDDEN)      # 336
W_ROWS = OFF_F4 + _rows(2 * HIDDEN)      # 400
V_ROWS = 24                              # 20 used rows, padded to a multiple of 8


# ----------------------------- Pallas kernel --------------------------------
def ae_old_kernel(xe_ref, w_ref, v_ref, out_ref):
    # xe_ref: (N, 8)  packed [qp(2) | feat(2) | eps(2) | pad(2)]
    # w_ref : (400, 128) tightly packed weights (static row offsets above)
    # v_ref : (24, 128)  packed bias / gamma / beta rows

    def lin(h, row_off, d_in, d_out, bi):
        w = w_ref[row_off:row_off + d_in, :d_out]
        b = v_ref[bi:bi + 1, :d_out]
        return jnp.dot(h, w, preferred_element_type=jnp.float32) + b

    def bn(h, gi, bi):
        d = h.shape[1]
        g = v_ref[gi:gi + 1, :d]
        bt = v_ref[bi:bi + 1, :d]
        # two independent reductions (shorter dependency chain than mean->center->reduce)
        mean = jnp.mean(h, axis=0, keepdims=True)
        msq = jnp.mean(h * h, axis=0, keepdims=True)
        var = msq - mean * mean                      # biased (train-mode) variance
        return g * (h - mean) * jax.lax.rsqrt(var + BN_EPS) + bt

    def lrelu(h):
        return jnp.maximum(h, 0.2 * h)               # LeakyReLU(0.2) as a single max

    xe = xe_ref[...]
    qp = xe[:, :LATENT]                              # query points
    h = xe[:, LATENT:INPUT_DIM]                      # encoder input features
    eps = xe[:, INPUT_DIM:INPUT_DIM + LATENT]        # reparameterization noise

    # ---- encoder: 3 x (Linear -> BN -> LeakyReLU) ----
    h = lrelu(bn(lin(h, OFF_E1, INPUT_DIM - 2, HIDDEN, 0), 1, 2))
    h = lrelu(bn(lin(h, OFF_E2, HIDDEN, 2 * HIDDEN, 3), 4, 5))
    h = lrelu(bn(lin(h, OFF_E3, 2 * HIDDEN, HIDDEN, 6), 7, 8))

    # ---- fc_mu & fc_var fused into one matmul ----
    mv = lin(h, OFF_MV, HIDDEN, 2 * LATENT, 9)
    mu = mv[:, :LATENT]
    log_var = mv[:, LATENT:]
    z = mu + eps * jnp.exp(0.5 * log_var)            # reparameterize

    # ---- decoder_input + decoder_sdf fused along lanes (block-diagonal W) ----
    # layer 1: decoder_input eats z, decoder_sdf eats [z, qp]; split matmul
    # avoids an in-kernel concat on the contraction dim.
    w1a = w_ref[OFF_F1:OFF_F1 + LATENT, :2 * HIDDEN]
    w1b = w_ref[OFF_F1 + LATENT:OFF_F1 + 2 * LATENT, :2 * HIDDEN]
    b1 = v_ref[10:11, :2 * HIDDEN]
    h = (jnp.dot(z, w1a, preferred_element_type=jnp.float32)
         + jnp.dot(qp, w1b, preferred_element_type=jnp.float32)
         + b1)
    h = lrelu(bn(h, 11, 12))                                          # (N, 64)
    h = lrelu(bn(lin(h, OFF_F2, 2 * HIDDEN, 4 * HIDDEN, 13), 14, 15))  # (N, 128)
    h = lrelu(bn(lin(h, OFF_F3, 4 * HIDDEN, 2 * HIDDEN, 16), 17, 18))  # (N, 64)
    tail = lin(h, OFF_F4, 2 * HIDDEN, OUT_PACK - LATENT, 19)           # (N, 6)

    # single full-row (lane-contiguous) store: [z | x_recon | sdf | pad]
    out_ref[...] = jnp.concatenate([z, tail], axis=1)


# ------------------------------ wrapper --------------------------------------
def ae_old_forward(x, eps, w_slab, v_slab):
    """x: (G, N, INPUT_DIM), eps: (G, N, LATENT). Each of the G groups is an
    independent batch (its own BatchNorm statistics), equivalent to calling the
    PyTorch module's forward once per group."""
    g, n = x.shape[0], x.shape[1]
    pad = jnp.zeros((g, n, OUT_PACK - INPUT_DIM - LATENT), jnp.float32)
    xe = jnp.concatenate([x, eps, pad], axis=-1)      # (G, N, 8)

    # advisory cost estimate (matmul flops dominate the arithmetic)
    mm = (2 * 32 + 32 * 64 + 64 * 32 + 32 * 4
          + 4 * 64 + 64 * 128 + 128 * 64 + 64 * 6)
    ce = pl.CostEstimate(
        flops=2 * g * n * mm,
        transcendentals=g * (n * LATENT + 6 * 64),
        bytes_accessed=int(w_slab.size * 4 + v_slab.size * 4
                           + xe.size * 4 + g * n * OUT_PACK * 4),
    )

    packed = pl.pallas_call(
        ae_old_kernel,
        out_shape=jax.ShapeDtypeStruct((g, n, OUT_PACK), jnp.float32),
        grid=(g,),
        in_specs=[
            pl.BlockSpec((None, n, OUT_PACK), lambda i: (i, 0, 0)),
            # constant block index -> weight/vector slabs stay VMEM-resident
            pl.BlockSpec((W_ROWS, W_LANES), lambda i: (0, 0)),
            pl.BlockSpec((V_ROWS, W_LANES), lambda i: (0, 0)),
        ],
        out_specs=pl.BlockSpec((None, n, OUT_PACK), lambda i: (i, 0, 0)),
        compiler_params=pltpu.CompilerParams(
            dimension_semantics=("parallel",),
            vmem_limit_bytes=32 * 1024 * 1024),
        cost_estimate=ce,
    )(xe, w_slab, v_slab)

    z = packed[..., :LATENT]
    x_rec = packed[..., LATENT:LATENT + (INPUT_DIM - 2)]
    sdf = packed[..., LATENT + (INPUT_DIM - 2):LATENT + (INPUT_DIM - 2) + 1]
    return x_rec, sdf, z


# ----------------------- deterministic parameter init ------------------------
def build_params(key):
    keys = iter(jax.random.split(key, 32))
    params = []

    def add_linear(fan_in, fan_out):
        bound = (6.0 / (fan_in + fan_out)) ** 0.5  # xavier_uniform_
        w = jax.random.uniform(next(keys), (fan_in, fan_out), jnp.float32,
                               -bound, bound)
        params.append(w)
        params.append(jnp.zeros((1, fan_out), jnp.float32))  # zero bias

    def add_bn(dim):
        params.append(jnp.ones((1, dim), jnp.float32))   # gamma
        params.append(jnp.zeros((1, dim), jnp.float32))  # beta

    # encoder
    add_linear(INPUT_DIM - 2, HIDDEN); add_bn(HIDDEN)
    add_linear(HIDDEN, 2 * HIDDEN);    add_bn(2 * HIDDEN)
    add_linear(2 * HIDDEN, HIDDEN);    add_bn(HIDDEN)
    # fc_mu, fc_var
    add_linear(HIDDEN, LATENT)
    add_linear(HIDDEN, LATENT)
    # decoder_input
    add_linear(LATENT, HIDDEN);        add_bn(HIDDEN)
    add_linear(HIDDEN, 2 * HIDDEN);    add_bn(2 * HIDDEN)
    add_linear(2 * HIDDEN, HIDDEN);    add_bn(HIDDEN)
    add_linear(HIDDEN, INPUT_DIM - 2)
    # decoder_sdf
    add_linear(LATENT + 2, HIDDEN);    add_bn(HIDDEN)
    add_linear(HIDDEN, 2 * HIDDEN);    add_bn(2 * HIDDEN)
    add_linear(2 * HIDDEN, HIDDEN);    add_bn(HIDDEN)
    add_linear(HIDDEN, 1)
    return params


# -------------------------- parameter slab packing ----------------------------
def pack_params(params):
    (We1, be1, ge1, bte1,
     We2, be2, ge2, bte2,
     We3, be3, ge3, bte3,
     Wmu, bmu, Wvar, bvar,
     Wd1, bd1, gd1, btd1,
     Wd2, bd2, gd2, btd2,
     Wd3, bd3, gd3, btd3,
     Wd4, bd4,
     Ws1, bs1, gs1, bts1,
     Ws2, bs2, gs2, bts2,
     Ws3, bs3, gs3, bts3,
     Ws4, bs4) = params

    # fc_mu / fc_var fused
    Wmv = jnp.concatenate([Wmu, Wvar], axis=1)            # (32, 4)
    bmv = jnp.concatenate([bmu, bvar], axis=1)            # (1, 4)

    # fused decoder layer 1: input [z | qp]; output [dec_input 32 | dec_sdf 32]
    Wf1 = jnp.zeros((2 * LATENT, 2 * HIDDEN), jnp.float32)
    Wf1 = Wf1.at[:LATENT, :HIDDEN].set(Wd1)               # (2,32) in rows 0:2
    Wf1 = Wf1.at[:, HIDDEN:].set(Ws1)                     # (4,32) in cols 32:64
    bf1 = jnp.concatenate([bd1, bs1], axis=1)
    gf1 = jnp.concatenate([gd1, gs1], axis=1)
    btf1 = jnp.concatenate([btd1, bts1], axis=1)

    # fused decoder layer 2 (block diagonal): (64, 128)
    Wf2 = jnp.zeros((2 * HIDDEN, 4 * HIDDEN), jnp.float32)
    Wf2 = Wf2.at[:HIDDEN, :2 * HIDDEN].set(Wd2)
    Wf2 = Wf2.at[HIDDEN:, 2 * HIDDEN:].set(Ws2)
    bf2 = jnp.concatenate([bd2, bs2], axis=1)
    gf2 = jnp.concatenate([gd2, gs2], axis=1)
    btf2 = jnp.concatenate([btd2, bts2], axis=1)

    # fused decoder layer 3 (block diagonal): (128, 64)
    Wf3 = jnp.zeros((4 * HIDDEN, 2 * HIDDEN), jnp.float32)
    Wf3 = Wf3.at[:2 * HIDDEN, :HIDDEN].set(Wd3)
    Wf3 = Wf3.at[2 * HIDDEN:, HIDDEN:].set(Ws3)
    bf3 = jnp.concatenate([bd3, bs3], axis=1)
    gf3 = jnp.concatenate([gd3, gs3], axis=1)
    btf3 = jnp.concatenate([btd3, bts3], axis=1)

    # fused final linear: (64, 6) -> [x_recon(2) | sdf(1) | pad(3)]
    Wf4 = jnp.zeros((2 * HIDDEN, OUT_PACK - LATENT), jnp.float32)
    Wf4 = Wf4.at[:HIDDEN, :INPUT_DIM - 2].set(Wd4)
    Wf4 = Wf4.at[HIDDEN:, INPUT_DIM - 2:INPUT_DIM - 1].set(Ws4)
    bf4 = jnp.zeros((1, OUT_PACK - LATENT), jnp.float32)
    bf4 = bf4.at[:, :INPUT_DIM - 2].set(bd4)
    bf4 = bf4.at[:, INPUT_DIM - 2:INPUT_DIM - 1].set(bs4)

    # tightly packed weight slab (400, 128)
    w_slab = jnp.zeros((W_ROWS, W_LANES), jnp.float32)
    for off, w in ((OFF_E1, We1), (OFF_E2, We2), (OFF_E3, We3), (OFF_MV, Wmv),
                   (OFF_F1, Wf1), (OFF_F2, Wf2), (OFF_F3, Wf3), (OFF_F4, Wf4)):
        w_slab = w_slab.at[off:off + w.shape[0], :w.shape[1]].set(w)

    # packed vector slab (24, 128): rows 0..19 used, 20..23 zero pad
    def pad_v(v):
        v = jnp.ravel(v)
        return jnp.zeros((W_LANES,), jnp.float32).at[:v.shape[0]].set(v)

    v_rows = [pad_v(v) for v in
              (be1, ge1, bte1, be2, ge2, bte2, be3, ge3, bte3,
               bmv,
               bf1, gf1, btf1, bf2, gf2, btf2, bf3, gf3, btf3,
               bf4)]
    v_rows += [jnp.zeros((W_LANES,), jnp.float32)] * (V_ROWS - len(v_rows))
    v_slab = jnp.stack(v_rows)                                            # (24,128)
    return w_slab, v_slab


# --------------------------- pure-JAX reference -------------------------------
def ae_old_reference(x, eps, params):
    p = iter(params)

    def lin(h):
        w = next(p); b = next(p)
        return h @ w + b

    def bn(h):
        g = next(p); bt = next(p)
        mean = jnp.mean(h, axis=0, keepdims=True)
        var = jnp.mean((h - mean) ** 2, axis=0, keepdims=True)
        return g * (h - mean) / jnp.sqrt(var + BN_EPS) + bt

    def lrelu(h):
        return jnp.where(h > 0, h, 0.2 * h)

    qp = x[:, :2]
    h = x[:, 2:]
    for _ in range(3):
        h = lrelu(bn(lin(h)))
    mu = lin(h)
    log_var = lin(h)
    z = mu + eps * jnp.exp(0.5 * log_var)
    h = z
    for _ in range(3):
        h = lrelu(bn(lin(h)))
    x_rec = lin(h)
    h = jnp.concatenate([z, qp], axis=1)
    for _ in range(3):
        h = lrelu(bn(lin(h)))
    sdf = lin(h)
    return x_rec, sdf, z


if __name__ == "__main__":
    key = jax.random.PRNGKey(0)
    k_param, k_x, k_eps = jax.random.split(key, 3)

    G = 4   # independent groups (grid axis; weights stay VMEM-resident across them)
    N = 8   # batch rows per group (sublane-aligned)
    x = jax.random.normal(k_x, (G, N, INPUT_DIM), jnp.float32)
    eps = jax.random.normal(k_eps, (G, N, LATENT), jnp.float32)
    params = build_params(k_param)
    w_slab, v_slab = pack_params(params)

    x_rec, sdf_pred, z = jax.block_until_ready(
        ae_old_forward(x, eps, w_slab, v_slab))

    assert x_rec.shape == (G, N, INPUT_DIM - 2)
    assert sdf_pred.shape == (G, N, 1)
    assert z.shape == (G, N, LATENT)

    # sanity check against plain-JAX reference (un-fused params), per group
    for g in range(G):
        x_rec_ref, sdf_ref, z_ref = ae_old_reference(x[g], eps[g], params)
        assert jnp.allclose(x_rec[g], x_rec_ref, atol=2e-3, rtol=2e-3)
        assert jnp.allclose(sdf_pred[g], sdf_ref, atol=2e-3, rtol=2e-3)
        assert jnp.allclose(z[g], z_ref, atol=2e-3, rtol=2e-3)

    print("KERNEL_OK")
</pallas_src>

<mosaic_0001>
module attributes {stable_mosaic.version = 11 : i64} {
  func.func @ae_old_kernel(%arg0: i32, %arg1: memref<1x8x8xf32, #tpu.memory_space<vmem>>, %arg2: memref<400x128xf32, #tpu.memory_space<vmem>>, %arg3: memref<24x128xf32, #tpu.memory_space<vmem>>, %arg4: memref<1x8x8xf32, #tpu.memory_space<vmem>>) attributes {dimension_semantics = [#tpu.dimension_semantics<parallel>], iteration_bounds = array<i64: 4>, scalar_prefetch = 0 : i64, scratch_operands = 0 : i64, tpu.core_type = #tpu.core_type<tc>, window_params = [{transform_indices = @transform_0, window_bounds = array<i64: 1, 8, 8>}, {pipeline_mode = #tpu.pipeline_mode<synchronous>, transform_indices = @transform_1, window_bounds = array<i64: 400, 128>}, {pipeline_mode = #tpu.pipeline_mode<synchronous>, transform_indices = @transform_2, window_bounds = array<i64: 24, 128>}, {transform_indices = @transform_3, window_bounds = array<i64: 1, 8, 8>}]} {
    %c0 = arith.constant 0 : index
    %c0_0 = arith.constant 0 : index
    %c0_1 = arith.constant 0 : index
    %0 = vector.load %arg1[%c0, %c0_0, %c0_1] : memref<1x8x8xf32, #tpu.memory_space<vmem>>, vector<1x8x8xf32>
    %1 = vector.shape_cast %0 : vector<1x8x8xf32> to vector<8x8xf32>
    %2 = vector.extract_strided_slice %1 {offsets = [0, 0], sizes = [8, 2], strides = [1, 1]} : vector<8x8xf32> to vector<8x2xf32>
    %3 = vector.extract_strided_slice %1 {offsets = [0, 2], sizes = [8, 2], strides = [1, 1]} : vector<8x8xf32> to vector<8x2xf32>
    %4 = vector.extract_strided_slice %1 {offsets = [0, 4], sizes = [8, 2], strides = [1, 1]} : vector<8x8xf32> to vector<8x2xf32>
    %c0_2 = arith.constant 0 : index
    %c0_3 = arith.constant 0 : index
    %5 = vector.load %arg2[%c0_2, %c0_3] : memref<400x128xf32, #tpu.memory_space<vmem>>, vector<2x32xf32>
    %c0_4 = arith.constant 0 : index
    %c0_5 = arith.constant 0 : index
    %6 = vector.load %arg3[%c0_4, %c0_5] : memref<24x128xf32, #tpu.memory_space<vmem>>, vector<1x32xf32>
    %cst = arith.constant dense<0.000000e+00> : vector<8x32xf32>
    %7 = tpu.matmul %3, %5, %cst {dimension_numbers = #tpu.dot_dimension_numbers<[1], [0], [0], [1], [0, 0, 1, 1], [], []>} : vector<8x2xf32>, vector<2x32xf32>, vector<8x32xf32> -> vector<8x32xf32>
    %8 = vector.broadcast %6 : vector<1x32xf32> to vector<8x32xf32>
    %9 = arith.addf %7, %8 : vector<8x32xf32>
    %c1 = arith.constant 1 : index
    %c0_6 = arith.constant 0 : index
    %10 = vector.load %arg3[%c1, %c0_6] : memref<24x128xf32, #tpu.memory_space<vmem>>, vector<1x32xf32>
    %c2 = arith.constant 2 : index
    %c0_7 = arith.constant 0 : index
    %11 = vector.load %arg3[%c2, %c0_7] : memref<24x128xf32, #tpu.memory_space<vmem>>, vector<1x32xf32>
    %cst_8 = arith.constant dense<0.000000e+00> : vector<32xf32>
    %12 = vector.multi_reduction <add>, %9, %cst_8 [0] : vector<8x32xf32> to vector<32xf32>
    %13 = vector.shape_cast %12 : vector<32xf32> to vector<1x32xf32>
    %cst_9 = arith.constant 8.000000e+00 : f32
    %14 = vector.broadcast %cst_9 : f32 to vector<1x32xf32>
    %15 = arith.divf %13, %14 : vector<1x32xf32>
    %16 = arith.mulf %9, %9 : vector<8x32xf32>
    %cst_10 = arith.constant dense<0.000000e+00> : vector<32xf32>
    %17 = vector.multi_reduction <add>, %16, %cst_10 [0] : vector<8x32xf32> to vector<32xf32>
    %18 = vector.shape_cast %17 : vector<32xf32> to vector<1x32xf32>
    %cst_11 = arith.constant 8.000000e+00 : f32
    %19 = vector.broadcast %cst_11 : f32 to vector<1x32xf32>
    %20 = arith.divf %18, %19 : vector<1x32xf32>
    %21 = arith.mulf %15, %15 : vector<1x32xf32>
    %22 = arith.subf %20, %21 : vector<1x32xf32>
    %23 = vector.broadcast %15 : vector<1x32xf32> to vector<8x32xf32>
    %24 = arith.subf %9, %23 : vector<8x32xf32>
    %25 = vector.broadcast %10 : vector<1x32xf32> to vector<8x32xf32>
    %26 = arith.mulf %25, %24 : vector<8x32xf32>
    %cst_12 = arith.constant 9.99999974E-6 : f32
    %27 = vector.broadcast %cst_12 : f32 to vector<1x32xf32>
    %28 = arith.addf %22, %27 : vector<1x32xf32>
    %29 = math.rsqrt %28 : vector<1x32xf32>
    %30 = vector.broadcast %29 : vector<1x32xf32> to vector<8x32xf32>
    %31 = arith.mulf %26, %30 : vector<8x32xf32>
    %32 = vector.broadcast %11 : vector<1x32xf32> to vector<8x32xf32>
    %33 = arith.addf %31, %32 : vector<8x32xf32>
    %cst_13 = arith.constant 2.000000e-01 : f32
    %34 = vector.broadcast %cst_13 : f32 to vector<8x32xf32>
    %35 = arith.mulf %34, %33 : vector<8x32xf32>
    %36 = arith.maximumf %33, %35 : vector<8x32xf32>
    %c8 = arith.constant 8 : index
    %c0_14 = arith.constant 0 : index
    %37 = vector.load %arg2[%c8, %c0_14] : memref<400x128xf32, #tpu.memory_space<vmem>>, vector<32x64xf32>
    %c3 = arith.constant 3 : index
    %c0_15 = arith.constant 0 : index
    %38 = vector.load %arg3[%c3, %c0_15] : memref<24x128xf32, #tpu.memory_space<vmem>>, vector<1x64xf32>
    %cst_16 = arith.constant dense<0.000000e+00> : vector<8x64xf32>
    %39 = tpu.matmul %36, %37, %cst_16 {dimension_numbers = #tpu.dot_dimension_numbers<[1], [0], [0], [1], [0, 0, 1, 1], [], []>} : vector<8x32xf32>, vector<32x64xf32>, vector<8x64xf32> -> vector<8x64xf32>
    %40 = vector.broadcast %38 : vector<1x64xf32> to vector<8x64xf32>
    %41 = arith.addf %39, %40 : vector<8x64xf32>
    %c4 = arith.constant 4 : index
    %c0_17 = arith.constant 0 : index
    %42 = vector.load %arg3[%c4, %c0_17] : memref<24x128xf32, #tpu.memory_space<vmem>>, vector<1x64xf32>
    %c5 = arith.constant 5 : index
    %c0_18 = arith.constant 0 : index
    %43 = vector.load %arg3[%c5, %c0_18] : memref<24x128xf32, #tpu.memory_space<vmem>>, vector<1x64xf32>
    %cst_19 = arith.constant dense<0.000000e+00> : vector<64xf32>
    %44 = vector.multi_reduction <add>, %41, %cst_19 [0] : vector<8x64xf32> to vector<64xf32>
    %45 = vector.shape_cast %44 : vector<64xf32> to vector<1x64xf32>
    %cst_20 = arith.constant 8.000000e+00 : f32
    %46 = vector.broadcast %cst_20 : f32 to vector<1x64xf32>
    %47 = arith.divf %45, %46 : vector<1x64xf32>
    %48 = arith.mulf %41, %41 : vector<8x64xf32>
    %cst_21 = arith.constant dense<0.000000e+00> : vector<64xf32>
    %49 = vector.multi_reduction <add>, %48, %cst_21 [0] : vector<8x64xf32> to vector<64xf32>
    %50 = vector.shape_cast %49 : vector<64xf32> to vector<1x64xf32>
    %cst_22 = arith.constant 8.000000e+00 : f32
    %51 = vector.broadcast %cst_22 : f32 to vector<1x64xf32>
    %52 = arith.divf %50, %51 : vector<1x64xf32>
    %53 = arith.mulf %47, %47 : vector<1x64xf32>
    %54 = arith.subf %52, %53 : vector<1x64xf32>
    %55 = vector.broadcast %47 : vector<1x64xf32> to vector<8x64xf32>
    %56 = arith.subf %41, %55 : vector<8x64xf32>
    %57 = vector.broadcast %42 : vector<1x64xf32> to vector<8x64xf32>
    %58 = arith.mulf %57, %56 : vector<8x64xf32>
    %cst_23 = arith.constant 9.99999974E-6 : f32
    %59 = vector.broadcast %cst_23 : f32 to vector<1x64xf32>
    %60 = arith.addf %54, %59 : vector<1x64xf32>
    %61 = math.rsqrt %60 : vector<1x64xf32>
    %62 = vector.broadcast %61 : vector<1x64xf32> to vector<8x64xf32>
    %63 = arith.mulf %58, %62 : vector<8x64xf32>
    %64 = vector.broadcast %43 : vector<1x64xf32> to vector<8x64xf32>
    %65 = arith.addf %63, %64 : vector<8x64xf32>
    %cst_24 = arith.constant 2.000000e-01 : f32
    %66 = vector.broadcast %cst_24 : f32 to vector<8x64xf32>
    %67 = arith.mulf %66, %65 : vector<8x64xf32>
    %68 = arith.maximumf %65, %67 : vector<8x64xf32>
    %c40 = arith.constant 40 : index
    %c0_25 = arith.constant 0 : index
    %69 = vector.load %arg2[%c40, %c0_25] : memref<400x128xf32, #tpu.memory_space<vmem>>, vector<64x32xf32>
    %c6 = arith.constant 6 : index
    %c0_26 = arith.constant 0 : index
    %70 = vector.load %arg3[%c6, %c0_26] : memref<24x128xf32, #tpu.memory_space<vmem>>, vector<1x32xf32>
    %cst_27 = arith.constant dense<0.000000e+00> : vector<8x32xf32>
    %71 = tpu.matmul %68, %69, %cst_27 {dimension_numbers = #tpu.dot_dimension_numbers<[1], [0], [0], [1], [0, 0, 1, 1], [], []>} : vector<8x64xf32>, vector<64x32xf32>, vector<8x32xf32> -> vector<8x32xf32>
    %72 = vector.broadcast %70 : vector<1x32xf32> to vector<8x32xf32>
    %73 = arith.addf %71, %72 : vector<8x32xf32>
    %c7 = arith.constant 7 : index
    %c0_28 = arith.constant 0 : index
    %74 = vector.load %arg3[%c7, %c0_28] : memref<24x128xf32, #tpu.memory_space<vmem>>, vector<1x32xf32>
    %c8_29 = arith.constant 8 : index
    %c0_30 = arith.constant 0 : index
    %75 = vector.load %arg3[%c8_29, %c0_30] : memref<24x128xf32, #tpu.memory_space<vmem>>, vector<1x32xf32>
    %cst_31 = arith.constant dense<0.000000e+00> : vector<32xf32>
    %76 = vector.multi_reduction <add>, %73, %cst_31 [0] : vector<8x32xf32> to vector<32xf32>
    %77 = vector.shape_cast %76 : vector<32xf32> to vector<1x32xf32>
    %cst_32 = arith.constant 8.000000e+00 : f32
    %78 = vector.broadcast %cst_32 : f32 to vector<1x32xf32>
    %79 = arith.divf %77, %78 : vector<1x32xf32>
    %80 = arith.mulf %73, %73 : vector<8x32xf32>
    %cst_33 = arith.constant dense<0.000000e+00> : vector<32xf32>
    %81 = vector.multi_reduction <add>, %80, %cst_33 [0] : vector<8x32xf32> to vector<32xf32>
    %82 = vector.shape_cast %81 : vector<32xf32> to vector<1x32xf32>
    %cst_34 = arith.constant 8.000000e+00 : f32
    %83 = vector.broadcast %cst_34 : f32 to vector<1x32xf32>
    %84 = arith.divf %82, %83 : vector<1x32xf32>
    %85 = arith.mulf %79, %79 : vector<1x32xf32>
    %86 = arith.subf %84, %85 : vector<1x32xf32>
    %87 = vector.broadcast %79 : vector<1x32xf32> to vector<8x32xf32>
    %88 = arith.subf %73, %87 : vector<8x32xf32>
    %89 = vector.broadcast %74 : vector<1x32xf32> to vector<8x32xf32>
    %90 = arith.mulf %89, %88 : vector<8x32xf32>
    %cst_35 = arith.constant 9.99999974E-6 : f32
    %91 = vector.broadcast %cst_35 : f32 to vector<1x32xf32>
    %92 = arith.addf %86, %91 : vector<1x32xf32>
    %93 = math.rsqrt %92 : vector<1x32xf32>
    %94 = vector.broadcast %93 : vector<1x32xf32> to vector<8x32xf32>
    %95 = arith.mulf %90, %94 : vector<8x32xf32>
    %96 = vector.broadcast %75 : vector<1x32xf32> to vector<8x32xf32>
    %97 = arith.addf %95, %96 : vector<8x32xf32>
    %cst_36 = arith.constant 2.000000e-01 : f32
    %98 = vector.broadcast %cst_36 : f32 to vector<8x32xf32>
    %99 = arith.mulf %98, %97 : vector<8x32xf32>
    %100 = arith.maximumf %97, %99 : vector<8x32xf32>
    %c104 = arith.constant 104 : index
    %c0_37 = arith.constant 0 : index
    %101 = vector.load %arg2[%c104, %c0_37] : memref<400x128xf32, #tpu.memory_space<vmem>>, vector<32x4xf32>
    %c9 = arith.constant 9 : index
    %c0_38 = arith.constant 0 : index
    %102 = vector.load %arg3[%c9, %c0_38] : memref<24x128xf32, #tpu.memory_space<vmem>>, vector<1x4xf32>
    %cst_39 = arith.constant dense<0.000000e+00> : vector<8x4xf32>
    %103 = tpu.matmul %100, %101, %cst_39 {dimension_numbers = #tpu.dot_dimension_numbers<[1], [0], [0], [1], [0, 0, 1, 1], [], []>} : vector<8x32xf32>, vector<32x4xf32>, vector<8x4xf32> -> vector<8x4xf32>
    %104 = vector.broadcast %102 : vector<1x4xf32> to vector<8x4xf32>
    %105 = arith.addf %103, %104 : vector<8x4xf32>
    %106 = vector.extract_strided_slice %105 {offsets = [0, 0], sizes = [8, 2], strides = [1, 1]} : vector<8x4xf32> to vector<8x2xf32>
    %107 = vector.extract_strided_slice %105 {offsets = [0, 2], sizes = [8, 2], strides = [1, 1]} : vector<8x4xf32> to vector<8x2xf32>
    %cst_40 = arith.constant 5.000000e-01 : f32
    %108 = vector.broadcast %cst_40 : f32 to vector<8x2xf32>
    %109 = arith.mulf %108, %107 : vector<8x2xf32>
    %110 = math.exp %109 : vector<8x2xf32>
    %111 = arith.mulf %4, %110 : vector<8x2xf32>
    %112 = arith.addf %106, %111 : vector<8x2xf32>
    %c136 = arith.constant 136 : index
    %c0_41 = arith.constant 0 : index
    %113 = vector.load %arg2[%c136, %c0_41] : memref<400x128xf32, #tpu.memory_space<vmem>>, vector<2x64xf32>
    %c138 = arith.constant 138 : index
    %c0_42 = arith.constant 0 : index
    %114 = vector.load %arg2[%c138, %c0_42] : memref<400x128xf32, #tpu.memory_space<vmem>>, vector<2x64xf32>
    %c10 = arith.constant 10 : index
    %c0_43 = arith.constant 0 : index
    %115 = vector.load %arg3[%c10, %c0_43] : memref<24x128xf32, #tpu.memory_space<vmem>>, vector<1x64xf32>
    %cst_44 = arith.constant dense<0.000000e+00> : vector<8x64xf32>
    %116 = tpu.matmul %112, %113, %cst_44 {dimension_numbers = #tpu.dot_dimension_numbers<[1], [0], [0], [1], [0, 0, 1, 1], [], []>} : vector<8x2xf32>, vector<2x64xf32>, vector<8x64xf32> -> vector<8x64xf32>
    %cst_45 = arith.constant dense<0.000000e+00> : vector<8x64xf32>
    %117 = tpu.matmul %2, %114, %cst_45 {dimension_numbers = #tpu.dot_dimension_numbers<[1], [0], [0], [1], [0, 0, 1, 1], [], []>} : vector<8x2xf32>, vector<2x64xf32>, vector<8x64xf32> -> vector<8x64xf32>
    %118 = arith.addf %116, %117 : vector<8x64xf32>
    %119 = vector.broadcast %115 : vector<1x64xf32> to vector<8x64xf32>
    %120 = arith.addf %118, %119 : vector<8x64xf32>
    %c11 = arith.constant 11 : index
    %c0_46 = arith.constant 0 : index
    %121 = vector.load %arg3[%c11, %c0_46] : memref<24x128xf32, #tpu.memory_space<vmem>>, vector<1x64xf32>
    %c12 = arith.constant 12 : index
    %c0_47 = arith.constant 0 : index
    %122 = vector.load %arg3[%c12, %c0_47] : memref<24x128xf32, #tpu.memory_space<vmem>>, vector<1x64xf32>
    %cst_48 = arith.constant dense<0.000000e+00> : vector<64xf32>
    %123 = vector.multi_reduction <add>, %120, %cst_48 [0] : vector<8x64xf32> to vector<64xf32>
    %124 = vector.shape_cast %123 : vector<64xf32> to vector<1x64xf32>
    %cst_49 = arith.constant 8.000000e+00 : f32
    %125 = vector.broadcast %cst_49 : f32 to vector<1x64xf32>
    %126 = arith.divf %124, %125 : vector<1x64xf32>
    %127 = arith.mulf %120, %120 : vector<8x64xf32>
    %cst_50 = arith.constant dense<0.000000e+00> : vector<64xf32>
    %128 = vector.multi_reduction <add>, %127, %cst_50 [0] : vector<8x64xf32> to vector<64xf32>
    %129 = vector.shape_cast %128 : vector<64xf32> to vector<1x64xf32>
    %cst_51 = arith.constant 8.000000e+00 : f32
    %130 = vector.broadcast %cst_51 : f32 to vector<1x64xf32>
    %131 = arith.divf %129, %130 : vector<1x64xf32>
    %132 = arith.mulf %126, %126 : vector<1x64xf32>
    %133 = arith.subf %131, %132 : vector<1x64xf32>
    %134 = vector.broadcast %126 : vector<1x64xf32> to vector<8x64xf32>
    %135 = arith.subf %120, %134 : vector<8x64xf32>
    %136 = vector.broadcast %121 : vector<1x64xf32> to vector<8x64xf32>
    %137 = arith.mulf %136, %135 : vector<8x64xf32>
    %cst_52 = arith.constant 9.99999974E-6 : f32
    %138 = vector.broadcast %cst_52 : f32 to vector<1x64xf32>
    %139 = arith.addf %133, %138 : vector<1x64xf32>
    %140 = math.rsqrt %139 : vector<1x64xf32>
    %141 = vector.broadcast %140 : vector<1x64xf32> to vector<8x64xf32>
    %142 = arith.mulf %137, %141 : vector<8x64xf32>
    %143 = vector.broadcast %122 : vector<1x64xf32> to vector<8x64xf32>
    %144 = arith.addf %142, %143 : vector<8x64xf32>
    %cst_53 = arith.constant 2.000000e-01 : f32
    %145 = vector.broadcast %cst_53 : f32 to vector<8x64xf32>
    %146 = arith.mulf %145, %144 : vector<8x64xf32>
    %147 = arith.maximumf %144, %146 : vector<8x64xf32>
    %c144 = arith.constant 144 : index
    %c0_54 = arith.constant 0 : index
    %148 = vector.load %arg2[%c144, %c0_54] : memref<400x128xf32, #tpu.memory_space<vmem>>, vector<64x128xf32>
    %c13 = arith.constant 13 : index
    %c0_55 = arith.constant 0 : index
    %149 = vector.load %arg3[%c13, %c0_55] : memref<24x128xf32, #tpu.memory_space<vmem>>, vector<1x128xf32>
    %cst_56 = arith.constant dense<0.000000e+00> : vector<8x128xf32>
    %150 = tpu.matmul %147, %148, %cst_56 {dimension_numbers = #tpu.dot_dimension_numbers<[1], [0], [0], [1], [0, 0, 1, 1], [], []>} : vector<8x64xf32>, vector<64x128xf32>, vector<8x128xf32> -> vector<8x128xf32>
    %151 = vector.broadcast %149 : vector<1x128xf32> to vector<8x128xf32>
    %152 = arith.addf %150, %151 : vector<8x128xf32>
    %c14 = arith.constant 14 : index
    %c0_57 = arith.constant 0 : index
    %153 = vector.load %arg3[%c14, %c0_57] : memref<24x128xf32, #tpu.memory_space<vmem>>, vector<1x128xf32>
    %c15 = arith.constant 15 : index
    %c0_58 = arith.constant 0 : index
    %154 = vector.load %arg3[%c15, %c0_58] : memref<24x128xf32, #tpu.memory_space<vmem>>, vector<1x128xf32>
    %cst_59 = arith.constant dense<0.000000e+00> : vector<128xf32>
    %155 = vector.multi_reduction <add>, %152, %cst_59 [0] : vector<8x128xf32> to vector<128xf32>
    %156 = vector.shape_cast %155 : vector<128xf32> to vector<1x128xf32>
    %cst_60 = arith.constant 8.000000e+00 : f32
    %157 = vector.broadcast %cst_60 : f32 to vector<1x128xf32>
    %158 = arith.divf %156, %157 : vector<1x128xf32>
    %159 = arith.mulf %152, %152 : vector<8x128xf32>
    %cst_61 = arith.constant dense<0.000000e+00> : vector<128xf32>
    %160 = vector.multi_reduction <add>, %159, %cst_61 [0] : vector<8x128xf32> to vector<128xf32>
    %161 = vector.shape_cast %160 : vector<128xf32> to vector<1x128xf32>
    %cst_62 = arith.constant 8.000000e+00 : f32
    %162 = vector.broadcast %cst_62 : f32 to vector<1x128xf32>
    %163 = arith.divf %161, %162 : vector<1x128xf32>
    %164 = arith.mulf %158, %158 : vector<1x128xf32>
    %165 = arith.subf %163, %164 : vector<1x128xf32>
    %166 = vector.broadcast %158 : vector<1x128xf32> to vector<8x128xf32>
    %167 = arith.subf %152, %166 : vector<8x128xf32>
    %168 = vector.broadcast %153 : vector<1x128xf32> to vector<8x128xf32>
    %169 = arith.mulf %168, %167 : vector<8x128xf32>
    %cst_63 = arith.constant 9.99999974E-6 : f32
    %170 = vector.broadcast %cst_63 : f32 to vector<1x128xf32>
    %171 = arith.addf %165, %170 : vector<1x128xf32>
    %172 = math.rsqrt %171 : vector<1x128xf32>
    %173 = vector.broadcast %172 : vector<1x128xf32> to vector<8x128xf32>
    %174 = arith.mulf %169, %173 : vector<8x128xf32>
    %175 = vector.broadcast %154 : vector<1x128xf32> to vector<8x128xf32>
    %176 = arith.addf %174, %175 : vector<8x128xf32>
    %cst_64 = arith.constant 2.000000e-01 : f32
    %177 = vector.broadcast %cst_64 : f32 to vector<8x128xf32>
    %178 = arith.mulf %177, %176 : vector<8x128xf32>
    %179 = arith.maximumf %176, %178 : vector<8x128xf32>
    %c208 = arith.constant 208 : index
    %c0_65 = arith.constant 0 : index
    %180 = vector.load %arg2[%c208, %c0_65] : memref<400x128xf32, #tpu.memory_space<vmem>>, vector<128x64xf32>
    %c16 = arith.constant 16 : index
    %c0_66 = arith.constant 0 : index
    %181 = vector.load %arg3[%c16, %c0_66] : memref<24x128xf32, #tpu.memory_space<vmem>>, vector<1x64xf32>
    %cst_67 = arith.constant dense<0.000000e+00> : vector<8x64xf32>
    %182 = tpu.matmul %179, %180, %cst_67 {dimension_numbers = #tpu.dot_dimension_numbers<[1], [0], [0], [1], [0, 0, 1, 1], [], []>} : vector<8x128xf32>, vector<128x64xf32>, vector<8x64xf32> -> vector<8x64xf32>
    %183 = vector.broadcast %181 : vector<1x64xf32> to vector<8x64xf32>
    %184 = arith.addf %182, %183 : vector<8x64xf32>
    %c17 = arith.constant 17 : index
    %c0_68 = arith.constant 0 : index
    %185 = vector.load %arg3[%c17, %c0_68] : memref<24x128xf32, #tpu.memory_space<vmem>>, vector<1x64xf32>
    %c18 = arith.constant 18 : index
    %c0_69 = arith.constant 0 : index
    %186 = vector.load %arg3[%c18, %c0_69] : memref<24x128xf32, #tpu.memory_space<vmem>>, vector<1x64xf32>
    %cst_70 = arith.constant dense<0.000000e+00> : vector<64xf32>
    %187 = vector.multi_reduction <add>, %184, %cst_70 [0] : vector<8x64xf32> to vector<64xf32>
    %188 = vector.shape_cast %187 : vector<64xf32> to vector<1x64xf32>
    %cst_71 = arith.constant 8.000000e+00 : f32
    %189 = vector.broadcast %cst_71 : f32 to vector<1x64xf32>
    %190 = arith.divf %188, %189 : vector<1x64xf32>
    %191 = arith.mulf %184, %184 : vector<8x64xf32>
    %cst_72 = arith.constant dense<0.000000e+00> : vector<64xf32>
    %192 = vector.multi_reduction <add>, %191, %cst_72 [0] : vector<8x64xf32> to vector<64xf32>
    %193 = vector.shape_cast %192 : vector<64xf32> to vector<1x64xf32>
    %cst_73 = arith.constant 8.000000e+00 : f32
    %194 = vector.broadcast %cst_73 : f32 to vector<1x64xf32>
    %195 = arith.divf %193, %194 : vector<1x64xf32>
    %196 = arith.mulf %190, %190 : vector<1x64xf32>
    %197 = arith.subf %195, %196 : vector<1x64xf32>
    %198 = vector.broadcast %190 : vector<1x64xf32> to vector<8x64xf32>
    %199 = arith.subf %184, %198 : vector<8x64xf32>
    %200 = vector.broadcast %185 : vector<1x64xf32> to vector<8x64xf32>
    %201 = arith.mulf %200, %199 : vector<8x64xf32>
    %cst_74 = arith.constant 9.99999974E-6 : f32
    %202 = vector.broadcast %cst_74 : f32 to vector<1x64xf32>
    %203 = arith.addf %197, %202 : vector<1x64xf32>
    %204 = math.rsqrt %203 : vector<1x64xf32>
    %205 = vector.broadcast %204 : vector<1x64xf32> to vector<8x64xf32>
    %206 = arith.mulf %201, %205 : vector<8x64xf32>
    %207 = vector.broadcast %186 : vector<1x64xf32> to vector<8x64xf32>
    %208 = arith.addf %206, %207 : vector<8x64xf32>
    %cst_75 = arith.constant 2.000000e-01 : f32
    %209 = vector.broadcast %cst_75 : f32 to vector<8x64xf32>
    %210 = arith.mulf %209, %208 : vector<8x64xf32>
    %211 = arith.maximumf %208, %210 : vector<8x64xf32>
    %c336 = arith.constant 336 : index
    %c0_76 = arith.constant 0 : index
    %212 = vector.load %arg2[%c336, %c0_76] : memref<400x128xf32, #tpu.memory_space<vmem>>, vector<64x6xf32>
    %c19 = arith.constant 19 : index
    %c0_77 = arith.constant 0 : index
    %213 = vector.load %arg3[%c19, %c0_77] : memref<24x128xf32, #tpu.memory_space<vmem>>, vector<1x6xf32>
    %cst_78 = arith.constant dense<0.000000e+00> : vector<8x6xf32>
    %214 = tpu.matmul %211, %212, %cst_78 {dimension_numbers = #tpu.dot_dimension_numbers<[1], [0], [0], [1], [0, 0, 1, 1], [], []>} : vector<8x64xf32>, vector<64x6xf32>, vector<8x6xf32> -> vector<8x6xf32>
    %215 = vector.broadcast %213 : vector<1x6xf32> to vector<8x6xf32>
    %216 = arith.addf %214, %215 : vector<8x6xf32>
    %217 = tpu.concatenate %112, %216 in 1 : vector<8x2xf32>, vector<8x6xf32> -> vector<8x8xf32>
    %c0_79 = arith.constant 0 : index
    %c0_80 = arith.constant 0 : index
    %c0_81 = arith.constant 0 : index
    %218 = vector.load %arg4[%c0_79, %c0_80, %c0_81] : memref<1x8x8xf32, #tpu.memory_space<vmem>>, vector<1x8x8xf32>
    %219 = vector.shape_cast %218 : vector<1x8x8xf32> to vector<8x8xf32>
    %220 = vector.shape_cast %217 : vector<8x8xf32> to vector<1x8x8xf32>
    tpu.vector_store %arg4[%c0_79, %c0_80, %c0_81], %220 {strides = array<i32>} : memref<1x8x8xf32, #tpu.memory_space<vmem>>, vector<1x8x8xf32>,
    return
  }
  func.func @transform_0(%arg0: i32) -> (i32, i32, i32) {
    %c0_i32 = arith.constant 0 : i32
    %c0_i32_0 = arith.constant 0 : i32
    %c0_i32_1 = arith.constant 0 : i32
    return %arg0, %c0_i32, %c0_i32_0 : i32, i32, i32
  }
  func.func @transform_1(%arg0: i32) -> (i32, i32) {
    %c0_i32 = arith.constant 0 : i32
    %c0_i32_0 = arith.constant 0 : i32
    %c0_i32_1 = arith.constant 0 : i32
    return %c0_i32, %c0_i32_0 : i32, i32
  }
  func.func @transform_2(%arg0: i32) -> (i32, i32) {
    %c0_i32 = arith.constant 0 : i32
    %c0_i32_0 = arith.constant 0 : i32
    %c0_i32_1 = arith.constant 0 : i32
    return %c0_i32, %c0_i32_0 : i32, i32
  }
  func.func @transform_3(%arg0: i32) -> (i32, i32, i32) {
    %c0_i32 = arith.constant 0 : i32
    %c0_i32_0 = arith.constant 0 : i32
    %c0_i32_1 = arith.constant 0 : i32
    return %arg0, %c0_i32, %c0_i32_0 : i32, i32, i32
  }
}

</mosaic_0001>

<llo_original>
// kernel: tpu_custom_call.1
$region0: #{tpu_custom_call.1}
  #allocation0 [shape = 'u32[]', space=smem, size = 0x4, offset = 0x4, fixed_abs, tag = 'smem constant byte address 0x4 - core index']
  #allocation1 [shape = 'u32[144,128]{1,0:T(1,128)}', space=vmem, size = 0x12000, scoped, tag = 'internal scratch']
  %s0 = inlined_call_operand.hbm [shape: f32[4,8,8], index: 0, kind: input, shape index: {}]
  %s1 = inlined_call_operand.hbm [shape: f32[400,128], index: 1, kind: input, shape index: {}]
  %s2 = inlined_call_operand.hbm [shape: f32[24,128], index: 2, kind: input, shape index: {}]
  %s3 = inlined_call_operand.hbm [shape: f32[4,8,8], index: 3, kind: output, shape index: {}]
  %s4 = sld [smem:[#allocation0]]
  $region57: #{tpu_custom_call.1} parent=0
    _
  %s6 = ssub.s32 1, %s4
  %s7 = scalar_select 0, %s6, %s4
  $region1: #{tpu_custom_call.1} parent=0
    #allocation2 [shape = 'u8[8192]{0}', space=vmem, size = 0x2000, scoped, tag = 'input window, operand 0']
    #allocation3 [shape = 's32[2]{0}', space=sflag, size = 0x8, scoped, tag = 'scoped memory for tpu_custom_call.1']
    #allocation4 [shape = 's32[2]{0}', space=sflag, size = 0x8, scoped, tag = 'scoped memory for tpu_custom_call.1']
    #allocation5 [shape = 'u8[204800]{0}', space=vmem, size = 0x32000, scoped, tag = 'input window, operand 1, single buffered']
    #allocation6 [shape = 's32[1]{0}', space=sflag, size = 0x4, scoped, tag = 'scoped memory for tpu_custom_call.1']
    #allocation7 [shape = 'u8[12288]{0}', space=vmem, size = 0x3000, scoped, tag = 'input window, operand 2, single buffered']
    #allocation8 [shape = 'u8[8192]{0}', space=vmem, size = 0x2000, scoped, tag = 'output window, operand 0']
    %8 = vsyncpa [#allocation3], 0
    %s9 = scalar_lea.sflag [#allocation3], 1
    %10 = vsyncpa %s9, 0
    %11 = vsyncpa [#allocation6], 0
    %12 = vsyncpa [#allocation4], 0
    %s13 = scalar_lea.sflag [#allocation4], 1
    %14 = vsyncpa %s13, 0
    loop: start=0, step=1, limit=6
    $region2: #{tpu_custom_call.1} parent=1 // loop_pre_header
      _
    $region3: #{tpu_custom_call.1} parent=1 // loop_header
      %s16 = sphi 0, %s20
      %p17 = scmp.ge.s32.totalorder %s16, 6
      %s26 = sphi 0, %s28
      %s29 = sphi 0, %s26
      %s30 = sphi 0, %s29
      %s46 = sphi 0, %s30
      %s50 = sphi 0, %s50
      %s52 = sphi 0, %s50
      %s53 = sphi 0, %s52
      %s67 = sphi 0, %s53
      %s71 = sphi 0, %s71
      %s73 = sphi 0, %s71
      %s74 = sphi 0, %s73
      %s88 = sphi 0, %s74
      %s94 = sphi 0, %s96
      %s97 = sphi 0, %s94
      %s98 = sphi 0, %s97
      %s114 = sphi 0, %s98
    $region4: #{tpu_custom_call.1} parent=1 // loop_header_branch
      %19 = sbr.rel (%p17) target = $region8
    $region5: #{tpu_custom_call.1} parent=1 // loop_body
      %s21 = ssub.s32 %s16, 1
      %s22 = ssub.s32 %s16, 2
      %s23 = sadd.s32 %s16, 1
      %s24 = ssub.s32 %s16, %s23
      %p25 = scmp.eq.s32.totalorder %s24, 0
      %s27 = sadd.s32 %s26, 1
      %s28 = scalar_select %p25, %s26, %s27
      %p31 = pneg %p25
      %p32 = scmp.eq.s32.totalorder %s16, 3
      %p33 = por %p31, %p32
      %p34 = scmp.ne.s32.totalorder %s26, %s29
      %p35 = scmp.eq.s32.totalorder %s16, 0
      %p36 = por %p34, %p35
      %p37 = scmp.ne.s32.totalorder %s26, %s29
      %p38 = scmp.eq.s32.totalorder %s21, 3
      %p39 = por %p37, %p38
      %p40 = scmp.ne.s32.totalorder %s29, %s30
      %p41 = scmp.eq.s32.totalorder %s21, 0
      %p42 = por %p40, %p41
      %p43 = scmp.ne.s32.totalorder %s29, %s30
      %p44 = scmp.eq.s32.totalorder %s22, 3
      %p45 = por %p43, %p44
      %p47 = scmp.ne.s32.totalorder %s30, %s46
      %p48 = scmp.eq.s32.totalorder %s22, 0
      %p49 = por %p47, %p48
      %s51 = sadd.s32 %s50, 1
      %p54 = scmp.eq.s32.totalorder %s16, 3
      %p55 = scmp.ne.s32.totalorder %s50, %s52
      %p56 = scmp.eq.s32.totalorder %s16, 0
      %p57 = por %p55, %p56
      %p58 = scmp.ne.s32.totalorder %s50, %s52
      %p59 = scmp.eq.s32.totalorder %s21, 3
      %p60 = por %p58, %p59
      %p61 = scmp.ne.s32.totalorder %s52, %s53
      %p62 = scmp.eq.s32.totalorder %s21, 0
      %p63 = por %p61, %p62
      %p64 = scmp.ne.s32.totalorder %s52, %s53
      %p65 = scmp.eq.s32.totalorder %s22, 3
      %p66 = por %p64, %p65
      %p68 = scmp.ne.s32.totalorder %s53, %s67
      %p69 = scmp.eq.s32.totalorder %s22, 0
      %p70 = por %p68, %p69
      %s72 = sadd.s32 %s71, 1
      %p75 = scmp.eq.s32.totalorder %s16, 3
      %p76 = scmp.ne.s32.totalorder %s71, %s73
      %p77 = scmp.eq.s32.totalorder %s16, 0
      %p78 = por %p76, %p77
      %p79 = scmp.ne.s32.totalorder %s71, %s73
      %p80 = scmp.eq.s32.totalorder %s21, 3
      %p81 = por %p79, %p80
      %p82 = scmp.ne.s32.totalorder %s73, %s74
      %p83 = scmp.eq.s32.totalorder %s21, 0
      %p84 = por %p82, %p83
      %p85 = scmp.ne.s32.totalorder %s73, %s74
      %p86 = scmp.eq.s32.totalorder %s22, 3
      %p87 = por %p85, %p86
      %p89 = scmp.ne.s32.totalorder %s74, %s88
      %p90 = scmp.eq.s32.totalorder %s22, 0
      %p91 = por %p89, %p90
      %s92 = ssub.s32 %s16, %s23
      %p93 = scmp.eq.s32.totalorder %s92, 0
      %s95 = sadd.s32 %s94, 1
      %s96 = scalar_select %p93, %s94, %s95
      %p99 = pneg %p93
      %p100 = scmp.eq.s32.totalorder %s16, 3
      %p101 = por %p99, %p100
      %p102 = scmp.ne.s32.totalorder %s94, %s97
      %p103 = scmp.eq.s32.totalorder %s16, 0
      %p104 = por %p102, %p103
      %p105 = scmp.ne.s32.totalorder %s94, %s97
      %p106 = scmp.eq.s32.totalorder %s21, 3
      %p107 = por %p105, %p106
      %p108 = scmp.ne.s32.totalorder %s97, %s98
      %p109 = scmp.eq.s32.totalorder %s21, 0
      %p110 = por %p108, %p109
      %p111 = scmp.ne.s32.totalorder %s97, %s98
      %p112 = scmp.eq.s32.totalorder %s22, 3
      %p113 = por %p111, %p112
      %p115 = scmp.ne.s32.totalorder %s98, %s114
      %p116 = scmp.eq.s32.totalorder %s22, 0
      %p117 = por %p115, %p116
      %p118 = scmp.le.s32.totalorder 1, %s16
      %p119 = scmp.lt.s32.totalorder %s16, 5
      %p120 = pnand %p118, %p119
      %p121 = pneg %p120
      // Predicated region
      $region9: #{tpu_custom_call.1} parent=5 // pred_check
        _
      $region10: #{tpu_custom_call.1} parent=5 // pred_check_branch
        %123 = sbr.rel (%p120) target = $region12
      $region11: #{tpu_custom_call.1} parent=5 // pred_region
        %s124 = ssub.s32 %s16, 1
        // Predicated region
        $region13: #{tpu_custom_call.1} parent=11 // pred_check
          %p125 = pneg %p63
        $region14: #{tpu_custom_call.1} parent=11 // pred_check_branch
          %127 = sbr.rel (%p125) target = $region16
        $region15: #{tpu_custom_call.1} parent=11 // pred_region
          %s129 = ssub.s32 6400, 6400
          %130 = vsyncadd [#allocation6], %s129
          %s131 = sshll.u32 [#allocation5], 4
          %s132 = int_to_ptr.vmem [resolvable:$true] %s131
          %137 = dma.hbm_to_vmem [thread:$0]  %s1, 6400, %s132, [#allocation6], 128, 128, 8
        $region16: #{tpu_custom_call.1} parent=11 // pred_fallthru
          _
        // Predicated region
        $region17: #{tpu_custom_call.1} parent=11 // pred_check
          %p138 = pneg %p84
        $region18: #{tpu_custom_call.1} parent=11 // pred_check_branch
          %140 = sbr.rel (%p138) target = $region20
        $region19: #{tpu_custom_call.1} parent=11 // pred_region
          %s142 = ssub.s32 384, 384
          %143 = vsyncadd [#allocation6], %s142
          %s144 = sshll.u32 [#allocation7], 4
          %s145 = int_to_ptr.vmem [resolvable:$true] %s144
          %150 = dma.hbm_to_vmem [thread:$0]  %s2, 384, %s145, [#allocation6], 128, 128, 8
        $region20: #{tpu_custom_call.1} parent=11 // pred_fallthru
          _
      $region12: #{tpu_custom_call.1} parent=5 // pred_fallthru
        _
      %p151 = scmp.lt.s32.totalorder %s16, 4
      // Predicated region
      $region21: #{tpu_custom_call.1} parent=5 // pred_check
        %p152 = pneg %p151
      $region22: #{tpu_custom_call.1} parent=5 // pred_check_branch
        %154 = sbr.rel (%p152) target = $region24
      $region23: #{tpu_custom_call.1} parent=5 // pred_region
        // Predicated region
        $region25: #{tpu_custom_call.1} parent=23 // pred_check
          %p155 = pneg %p36
        $region26: #{tpu_custom_call.1} parent=23 // pred_check_branch
          %157 = sbr.rel (%p155) target = $region28
        $region27: #{tpu_custom_call.1} parent=23 // pred_region
          %s158 = sand.u32 %s26, 1
          %s159 = scalar_lea.sflag [#allocation3], %s158
          %s160 = sand.u32 %s26, 1
          %s161 = smul.addr %s160, 8
          %s162 = scalar_lea.vmem [#allocation2], %s161
          %s164 = ssub.s32 128, 128
          %165 = vsyncadd %s159, %s164
          %s166 = smul.addr %s16, 128
          %s167 = scalar_lea.hbm %s0, %s166
          %s169 = sshll.u32 %s162, 4
          %s170 = int_to_ptr.vmem [resolvable:$true] %s169
          %172 = dma.hbm_to_vmem [thread:$0]  %s167, 128, %s170, %s159
        $region28: #{tpu_custom_call.1} parent=23 // pred_fallthru
          _
      $region24: #{tpu_custom_call.1} parent=5 // pred_fallthru
        _
      %p173 = scmp.le.s32.totalorder 1, %s16
      %p174 = scmp.lt.s32.totalorder %s16, 5
      %p175 = pnand %p173, %p174
      %p176 = pneg %p175
      // Predicated region
      $region29: #{tpu_custom_call.1} parent=5 // pred_check
        _
      $region30: #{tpu_custom_call.1} parent=5 // pred_check_branch
        %178 = sbr.rel (%p175) target = $region32
      $region31: #{tpu_custom_call.1} parent=5 // pred_region
        %s179 = ssub.s32 %s16, 1
        %s180 = sand.u32 %s29, 1
        %s181 = scalar_lea.sflag [#allocation3], %s180
        %s182 = sand.u32 %s29, 1
        %s183 = smul.addr %s182, 8
        %s184 = scalar_lea.vmem [#allocation2], %s183
        // Predicated region
        $region33: #{tpu_custom_call.1} parent=31 // pred_check
          %p185 = pneg %p42
        $region34: #{tpu_custom_call.1} parent=31 // pred_check_branch
          %187 = sbr.rel (%p185) target = $region36
        $region35: #{tpu_custom_call.1} parent=31 // pred_region
          %188 = dma.done %s181, 128
        $region36: #{tpu_custom_call.1} parent=31 // pred_fallthru
          _
        // Predicated region
        $region37: #{tpu_custom_call.1} parent=31 // pred_check
          %p189 = pneg %p63
        $region38: #{tpu_custom_call.1} parent=31 // pred_check_branch
          %191 = sbr.rel (%p189) target = $region40
        $region39: #{tpu_custom_call.1} parent=31 // pred_region
          %192 = dma.done [#allocation6], 6400
        $region40: #{tpu_custom_call.1} parent=31 // pred_fallthru
          _
        // Predicated region
        $region41: #{tpu_custom_call.1} parent=31 // pred_check
          %p193 = pneg %p84
        $region42: #{tpu_custom_call.1} parent=31 // pred_check_branch
          %195 = sbr.rel (%p193) target = $region44
        $region43: #{tpu_custom_call.1} parent=31 // pred_region
          %196 = dma.done [#allocation6], 384
        $region44: #{tpu_custom_call.1} parent=31 // pred_fallthru
          _
        %s197 = sand.u32 %s29, 1
        %s198 = scalar_lea.sflag [#allocation3], %s197
        %s199 = sand.u32 %s29, 1
        %s200 = smul.addr %s199, 8
        %s201 = scalar_lea.vmem [#allocation2], %s200
        %p202 = pneg %p42
        %p203 = pneg %p39
        %p204 = pneg %p63
        %p205 = pneg %p60
        %p206 = pneg %p84
        %p207 = pneg %p81
        %p208 = pneg %p110
        %p209 = pneg %p107
        %s210 = sand.u32 %s97, 1
        %s211 = scalar_lea.sflag [#allocation4], %s210
        %s212 = sand.u32 %s97, 1
        %s213 = smul.addr %s212, 8
        %s214 = scalar_lea.vmem [#allocation8], %s213
        %v215 = vld [vmem:[%s184] sm:$0xff]
        %v216 = vld [vmem:[#allocation5] sm:$0x3]
        %v217 = vld [vmem:[#allocation7] sm:$0x1]
        %v218 = vlaneseq
        %v219 = vshrl.u32 %v218, 7
        %v220 = vsub.s32 0, %v219
        %v221 = vrot.slane %v217, %v220
        %223 = vrot.lane.b32.xlu0 %v215, 126
        %v224 = vpop.permute.xlu0 %223
        %vm225 = vcmask 15360
        %v226 = vsel %vm225, %v224, 0
        %vm228 = vcmask 1041408
        %v230 = vsel %vm228, %v216, 0
        %232 = vmatprep.subr.mxu0 0.0
        %233 = vmatpush1.msra.mxu0 %v230
        %234 = vmatprep.subr.mxu0 0.0
        %235 = vmatpush1.msra.mxu0 0.0
        %236 = vmatprep.subr.mxu0 0.0
        %237 = vmatpush1.msra.mxu0 0.0
        %238 = vmatprep.subr.mxu0 0.0
        %239 = vmatpush1.msra.mxu0 0.0
        %240 = vmatprep.subr.mxu0 0.0
        %241 = vmatpush1.msra.mxu0 0.0
        %242 = vmatprep.subr.mxu0 0.0
        %243 = vmatpush1.msra.mxu0 0.0
        %244 = vmatprep.subr.mxu0 0.0
        %245 = vmatpush1.msra.mxu0 0.0
        %246 = vmatprep.subr.mxu0 0.0
        %247 = vmatpush1.msra.mxu0 0.0
        %248 = vmatprep.subr.mxu0 0.0
        %249 = vmatpush1.msra.mxu0 0.0
        %250 = vmatprep.subr.mxu0 0.0
        %251 = vmatpush1.msra.mxu0 0.0
        %252 = vmatprep.subr.mxu0 0.0
        %253 = vmatpush1.msra.mxu0 0.0
        %254 = vmatprep.subr.mxu0 0.0
        %255 = vmatpush1.msra.mxu0 0.0
        %256 = vmatprep.subr.mxu0 0.0
        %257 = vmatpush1.msra.mxu0 0.0
        %258 = vmatprep.subr.mxu0 0.0
        %259 = vmatpush1.msra.mxu0 0.0
        %260 = vmatprep.subr.mxu0 0.0
        %261 = vmatpush1.msra.mxu0 0.0
        %262 = vmatprep.subr.mxu0 0.0
        %263 = vmatpush1.msra.mxu0 0.0
        %264 = vmatprep.subr.mxu0 0.0
        %265 = vmatpush1.msra.mxu0 0.0
        %266 = vmatprep.subr.mxu0 0.0
        %267 = vmatpush1.msra.mxu0 0.0
        %268 = vmatprep.subr.mxu0 0.0
        %269 = vmatpush1.msra.mxu0 0.0
        %270 = vmatprep.subr.mxu0 0.0
        %271 = vmatpush1.msra.mxu0 0.0
        %272 = vmatprep.subr.mxu0 0.0
        %273 = vmatpush1.msra.mxu0 0.0
        %274 = vmatprep.subr.mxu0 0.0
        %275 = vmatpush1.msra.mxu0 0.0
        %276 = vmatprep.subr.mxu0 0.0
        %277 = vmatpush1.msra.mxu0 0.0
        %278 = vmatprep.subr.mxu0 0.0
        %279 = vmatpush1.msra.mxu0 0.0
        %280 = vmatprep.subr.mxu0 0.0
        %281 = vmatpush1.msra.mxu0 0.0
        %282 = vmatprep.subr.mxu0 0.0
        %283 = vmatpush1.msra.mxu0 0.0
        %284 = vmatprep.subr.mxu0 0.0
        %285 = vmatpush1.msra.mxu0 0.0
        %286 = vmatprep.subr.mxu0 0.0
        %287 = vmatpush1.msra.mxu0 0.0
        %288 = vmatprep.subr.mxu0 0.0
        %289 = vmatpush1.msra.mxu0 0.0
        %290 = vmatprep.subr.mxu0 0.0
        %291 = vmatpush1.msra.mxu0 0.0
        %292 = vmatprep.subr.mxu0 0.0
        %293 = vmatpush1.msra.mxu0 0.0
        %294 = vmatprep.subr.mxu0 0.0
        %295 = vmatpush1.msra.mxu0 0.0
        %296 = vmatprep.mubr.f32.mxu0 0.0
        %297 = vmatmul.mubr.f32.gmra.mrb[0].mxu0 %v226
        %v298 = vpop.f32.mrb[0].mxu0
        %v299 = vadd.f32 %v221, %v298
        %v300 = vpop.f32.mrb[0].mxu0
        %301 = vdwg.mxu0
        %v302 = vld [vmem:[#allocation7 + $0x1] sm:$0x1]
        %v303 = vld [vmem:[#allocation7 + $0x2] sm:$0x1]
        %vm304 = vcmask 261120
        %v305 = vsel %vm304, %v299, 0.0
        %v306 = vrot.slane %v305, 4
        %v307 = vadd.f32 %v305, %v306
        %v308 = vrot.slane %v307, 2
        %v309 = vadd.f32 %v307, %v308
        %v310 = vrot.slane %v309, 1
        %v311 = vadd.f32 %v309, %v310
        %v312 = vrcp.pop 8.0
        %v313 = vmul.f32 %v311, %v312
        %v314 = vmul.f32 %v299, %v299
        %v315 = vsel %vm304, %v314, 0.0
        %v316 = vrot.slane %v315, 4
        %v317 = vadd.f32 %v315, %v316
        %v318 = vrot.slane %v317, 2
        %v319 = vadd.f32 %v317, %v318
        %v320 = vrot.slane %v319, 1
        %v321 = vadd.f32 %v319, %v320
        %v322 = vmul.f32 %v321, %v312
        %v323 = vmul.f32 %v313, %v313
        %v324 = vsub.f32 %v322, %v323
        %v325 = vsub.f32 %v299, %v313
        %v326 = vlaneseq
        %v327 = vshrl.u32 %v326, 7
        %v328 = vsub.s32 0, %v327
        %v329 = vrot.slane %v302, %v328
        %v330 = vmul.f32 %v329, %v325
        %v331 = vadd.f32 %v324, 1e-05
        %v332 = vrsqrt.pop %v331
        %v333 = vmul.f32 %v330, %v332
        %v334 = vlaneseq
        %v335 = vshrl.u32 %v334, 7
        %v336 = vsub.s32 0, %v335
        %v337 = vrot.slane %v303, %v336
        %v338 = vadd.f32 %v333, %v337
        %v339 = vmul.f32 %v338, 0.2
        %v340 = vmax.f32 %v338, %v339
        %v341 = vld [vmem:[#allocation5 + $0x8] sm:$0xff]
        %v342 = vld [vmem:[#allocation5 + $0x10] sm:$0xff]
        %v343 = vld [vmem:[#allocation5 + $0x18] sm:$0xff]
        %v344 = vld [vmem:[#allocation5 + $0x20] sm:$0xff]
        %v345 = vld [vmem:[#allocation7 + $0x3] sm:$0x1]
        %v346 = vlaneseq
        %v347 = vshrl.u32 %v346, 7
        %v348 = vsub.s32 0, %v347
        %v349 = vrot.slane %v345, %v348
        %v351 = vsel %vm304, %v340, 0
        %353 = vmatprep.subr.mxu0 0.0
        %354 = vmatpush1.msra.mxu0 %v341
        %355 = vmatprep.subr.mxu0 0.0
        %356 = vmatpush1.msra.mxu0 %v342
        %357 = vmatprep.subr.mxu0 0.0
        %358 = vmatpush1.msra.mxu0 %v343
        %359 = vmatprep.subr.mxu0 0.0
        %360 = vmatpush1.msra.mxu0 %v344
        %361 = vmatprep.subr.mxu0 0.0
        %362 = vmatpush1.msra.mxu0 0.0
        %363 = vmatprep.subr.mxu0 0.0
        %364 = vmatpush1.msra.mxu0 0.0
        %365 = vmatprep.subr.mxu0 0.0
        %366 = vmatpush1.msra.mxu0 0.0
        %367 = vmatprep.subr.mxu0 0.0
        %368 = vmatpush1.msra.mxu0 0.0
        %369 = vmatprep.subr.mxu0 0.0
        %370 = vmatpush1.msra.mxu0 0.0
        %371 = vmatprep.subr.mxu0 0.0
        %372 = vmatpush1.msra.mxu0 0.0
        %373 = vmatprep.subr.mxu0 0.0
        %374 = vmatpush1.msra.mxu0 0.0
        %375 = vmatprep.subr.mxu0 0.0
        %376 = vmatpush1.msra.mxu0 0.0
        %377 = vmatprep.subr.mxu0 0.0
        %378 = vmatpush1.msra.mxu0 0.0
        %379 = vmatprep.subr.mxu0 0.0
        %380 = vmatpush1.msra.mxu0 0.0
        %381 = vmatprep.subr.mxu0 0.0
        %382 = vmatpush1.msra.mxu0 0.0
        %383 = vmatprep.subr.mxu0 0.0
        %384 = vmatpush1.msra.mxu0 0.0
        %385 = vmatprep.subr.mxu0 0.0
        %386 = vmatpush1.msra.mxu0 0.0
        %387 = vmatprep.subr.mxu0 0.0
        %388 = vmatpush1.msra.mxu0 0.0
        %389 = vmatprep.subr.mxu0 0.0
        %390 = vmatpush1.msra.mxu0 0.0
        %391 = vmatprep.subr.mxu0 0.0
        %392 = vmatpush1.msra.mxu0 0.0
        %393 = vmatprep.subr.mxu0 0.0
        %394 = vmatpush1.msra.mxu0 0.0
        %395 = vmatprep.subr.mxu0 0.0
        %396 = vmatpush1.msra.mxu0 0.0
        %397 = vmatprep.subr.mxu0 0.0
        %398 = vmatpush1.msra.mxu0 0.0
        %399 = vmatprep.subr.mxu0 0.0
        %400 = vmatpush1.msra.mxu0 0.0
        %401 = vmatprep.subr.mxu0 0.0
        %402 = vmatpush1.msra.mxu0 0.0
        %403 = vmatprep.subr.mxu0 0.0
        %404 = vmatpush1.msra.mxu0 0.0
        %405 = vmatprep.subr.mxu0 0.0
        %406 = vmatpush1.msra.mxu0 0.0
        %407 = vmatprep.subr.mxu0 0.0
        %408 = vmatpush1.msra.mxu0 0.0
        %409 = vmatprep.subr.mxu0 0.0
        %410 = vmatpush1.msra.mxu0 0.0
        %411 = vmatprep.subr.mxu0 0.0
        %412 = vmatpush1.msra.mxu0 0.0
        %413 = vmatprep.subr.mxu0 0.0
        %414 = vmatpush1.msra.mxu0 0.0
        %415 = vmatprep.subr.mxu0 0.0
        %416 = vmatpush1.msra.mxu0 0.0
        %417 = vmatprep.mubr.f32.mxu0 0.0
        %418 = vmatmul.mubr.f32.gmra.mrb[0].mxu0 %v351
        %v419 = vpop.f32.mrb[0].mxu0
        %v420 = vadd.f32 %v349, %v419
        %v421 = vpop.f32.mrb[0].mxu0
        %422 = vdwg.mxu0
        %v423 = vld [vmem:[#allocation7 + $0x4] sm:$0x1]
        %v424 = vld [vmem:[#allocation7 + $0x5] sm:$0x1]
        %vm425 = vcmask 523264
        %v426 = vsel %vm425, %v420, 0.0
        %v427 = vrot.slane %v426, 4
        %v428 = vadd.f32 %v426, %v427
        %v429 = vrot.slane %v428, 2
        %v430 = vadd.f32 %v428, %v429
        %v431 = vrot.slane %v430, 1
        %v432 = vadd.f32 %v430, %v431
        %v433 = vmul.f32 %v432, %v312
        %v434 = vmul.f32 %v420, %v420
        %v435 = vsel %vm425, %v434, 0.0
        %v436 = vrot.slane %v435, 4
        %v437 = vadd.f32 %v435, %v436
        %v438 = vrot.slane %v437, 2
        %v439 = vadd.f32 %v437, %v438
        %v440 = vrot.slane %v439, 1
        %v441 = vadd.f32 %v439, %v440
        %v442 = vmul.f32 %v441, %v312
        %v443 = vmul.f32 %v433, %v433
        %v444 = vsub.f32 %v442, %v443
        %v445 = vsub.f32 %v420, %v433
        %v446 = vlaneseq
        %v447 = vshrl.u32 %v446, 7
        %v448 = vsub.s32 0, %v447
        %v449 = vrot.slane %v423, %v448
        %v450 = vmul.f32 %v449, %v445
        %v451 = vadd.f32 %v444, 1e-05
        %v452 = vrsqrt.pop %v451
        %v453 = vmul.f32 %v450, %v452
        %v454 = vlaneseq
        %v455 = vshrl.u32 %v454, 7
        %v456 = vsub.s32 0, %v455
        %v457 = vrot.slane %v424, %v456
        %v458 = vadd.f32 %v453, %v457
        %v459 = vmul.f32 %v458, 0.2
        %v460 = vmax.f32 %v458, %v459
        %v461 = vld [vmem:[#allocation5 + $0x28] sm:$0xff]
        %v462 = vld [vmem:[#allocation5 + $0x30] sm:$0xff]
        %v463 = vld [vmem:[#allocation5 + $0x38] sm:$0xff]
        %v464 = vld [vmem:[#allocation5 + $0x40] sm:$0xff]
        %v465 = vld [vmem:[#allocation5 + $0x48] sm:$0xff]
        %v466 = vld [vmem:[#allocation5 + $0x50] sm:$0xff]
        %v467 = vld [vmem:[#allocation5 + $0x58] sm:$0xff]
        %v468 = vld [vmem:[#allocation5 + $0x60] sm:$0xff]
        %v469 = vld [vmem:[#allocation7 + $0x6] sm:$0x1]
        %v470 = vlaneseq
        %v471 = vshrl.u32 %v470, 7
        %v472 = vsub.s32 0, %v471
        %v473 = vrot.slane %v469, %v472
        %v475 = vsel %vm425, %v460, 0
        %477 = vmatprep.subr.mxu0 0.0
        %478 = vmatpush1.msra.mxu0 %v461
        %479 = vmatprep.subr.mxu0 0.0
        %480 = vmatpush1.msra.mxu0 %v462
        %481 = vmatprep.subr.mxu0 0.0
        %482 = vmatpush1.msra.mxu0 %v463
        %483 = vmatprep.subr.mxu0 0.0
        %484 = vmatpush1.msra.mxu0 %v464
        %485 = vmatprep.subr.mxu0 0.0
        %486 = vmatpush1.msra.mxu0 %v465
        %487 = vmatprep.subr.mxu0 0.0
        %488 = vmatpush1.msra.mxu0 %v466
        %489 = vmatprep.subr.mxu0 0.0
        %490 = vmatpush1.msra.mxu0 %v467
        %491 = vmatprep.subr.mxu0 0.0
        %492 = vmatpush1.msra.mxu0 %v468
        %493 = vmatprep.subr.mxu0 0.0
        %494 = vmatpush1.msra.mxu0 0.0
        %495 = vmatprep.subr.mxu0 0.0
        %496 = vmatpush1.msra.mxu0 0.0
        %497 = vmatprep.subr.mxu0 0.0
        %498 = vmatpush1.msra.mxu0 0.0
        %499 = vmatprep.subr.mxu0 0.0
        %500 = vmatpush1.msra.mxu0 0.0
        %501 = vmatprep.subr.mxu0 0.0
        %502 = vmatpush1.msra.mxu0 0.0
        %503 = vmatprep.subr.mxu0 0.0
        %504 = vmatpush1.msra.mxu0 0.0
        %505 = vmatprep.subr.mxu0 0.0
        %506 = vmatpush1.msra.mxu0 0.0
        %507 = vmatprep.subr.mxu0 0.0
        %508 = vmatpush1.msra.mxu0 0.0
        %509 = vmatprep.subr.mxu0 0.0
        %510 = vmatpush1.msra.mxu0 0.0
        %511 = vmatprep.subr.mxu0 0.0
        %512 = vmatpush1.msra.mxu0 0.0
        %513 = vmatprep.subr.mxu0 0.0
        %514 = vmatpush1.msra.mxu0 0.0
        %515 = vmatprep.subr.mxu0 0.0
        %516 = vmatpush1.msra.mxu0 0.0
        %517 = vmatprep.subr.mxu0 0.0
        %518 = vmatpush1.msra.mxu0 0.0
        %519 = vmatprep.subr.mxu0 0.0
        %520 = vmatpush1.msra.mxu0 0.0
        %521 = vmatprep.subr.mxu0 0.0
        %522 = vmatpush1.msra.mxu0 0.0
        %523 = vmatprep.subr.mxu0 0.0
        %524 = vmatpush1.msra.mxu0 0.0
        %525 = vmatprep.subr.mxu0 0.0
        %526 = vmatpush1.msra.mxu0 0.0
        %527 = vmatprep.subr.mxu0 0.0
        %528 = vmatpush1.msra.mxu0 0.0
        %529 = vmatprep.subr.mxu0 0.0
        %530 = vmatpush1.msra.mxu0 0.0
        %531 = vmatprep.subr.mxu0 0.0
        %532 = vmatpush1.msra.mxu0 0.0
        %533 = vmatprep.subr.mxu0 0.0
        %534 = vmatpush1.msra.mxu0 0.0
        %535 = vmatprep.subr.mxu0 0.0
        %536 = vmatpush1.msra.mxu0 0.0
        %537 = vmatprep.subr.mxu0 0.0
        %538 = vmatpush1.msra.mxu0 0.0
        %539 = vmatprep.subr.mxu0 0.0
        %540 = vmatpush1.msra.mxu0 0.0
        %541 = vmatprep.mubr.f32.mxu0 0.0
        %542 = vmatmul.mubr.f32.gmra.mrb[0].mxu0 %v475
        %v543 = vpop.f32.mrb[0].mxu0
        %v544 = vadd.f32 %v473, %v543
        %v545 = vpop.f32.mrb[0].mxu0
        %546 = vdwg.mxu0
        %v547 = vld [vmem:[#allocation7 + $0x7] sm:$0x1]
        %v548 = vld [vmem:[#allocation7 + $0x8] sm:$0x1]
        %v549 = vsel %vm304, %v544, 0.0
        %v550 = vrot.slane %v549, 4
        %v551 = vadd.f32 %v549, %v550
        %v552 = vrot.slane %v551, 2
        %v553 = vadd.f32 %v551, %v552
        %v554 = vrot.slane %v553, 1
        %v555 = vadd.f32 %v553, %v554
        %v556 = vmul.f32 %v555, %v312
        %v557 = vmul.f32 %v544, %v544
        %v558 = vsel %vm304, %v557, 0.0
        %v559 = vrot.slane %v558, 4
        %v560 = vadd.f32 %v558, %v559
        %v561 = vrot.slane %v560, 2
        %v562 = vadd.f32 %v560, %v561
        %v563 = vrot.slane %v562, 1
        %v564 = vadd.f32 %v562, %v563
        %v565 = vmul.f32 %v564, %v312
        %v566 = vmul.f32 %v556, %v556
        %v567 = vsub.f32 %v565, %v566
        %v568 = vsub.f32 %v544, %v556
        %v569 = vlaneseq
        %v570 = vshrl.u32 %v569, 7
        %v571 = vsub.s32 0, %v570
        %v572 = vrot.slane %v547, %v571
        %v573 = vmul.f32 %v572, %v568
        %v574 = vadd.f32 %v567, 1e-05
        %v575 = vrsqrt.pop %v574
        %v576 = vmul.f32 %v573, %v575
        %v577 = vlaneseq
        %v578 = vshrl.u32 %v577, 7
        %v579 = vsub.s32 0, %v578
        %v580 = vrot.slane %v548, %v579
        %v581 = vadd.f32 %v576, %v580
        %v582 = vmul.f32 %v581, 0.2
        %v583 = vmax.f32 %v581, %v582
        %v584 = vld [vmem:[#allocation5 + $0x68] sm:$0xff]
        %v585 = vld [vmem:[#allocation5 + $0x70] sm:$0xff]
        %v586 = vld [vmem:[#allocation5 + $0x78] sm:$0xff]
        %v587 = vld [vmem:[#allocation5 + $0x80] sm:$0xff]
        %v588 = vld [vmem:[#allocation7 + $0x9] sm:$0x1]
        %v589 = vlaneseq
        %v590 = vshrl.u32 %v589, 7
        %v591 = vsub.s32 0, %v590
        %v592 = vrot.slane %v588, %v591
        %v594 = vsel %vm304, %v583, 0
        %596 = vmatprep.subr.mxu0 0.0
        %597 = vmatpush1.msra.mxu0 %v584
        %598 = vmatprep.subr.mxu0 0.0
        %599 = vmatpush1.msra.mxu0 %v585
        %600 = vmatprep.subr.mxu0 0.0
        %601 = vmatpush1.msra.mxu0 %v586
        %602 = vmatprep.subr.mxu0 0.0
        %603 = vmatpush1.msra.mxu0 %v587
        %604 = vmatprep.subr.mxu0 0.0
        %605 = vmatpush1.msra.mxu0 0.0
        %606 = vmatprep.subr.mxu0 0.0
        %607 = vmatpush1.msra.mxu0 0.0
        %608 = vmatprep.subr.mxu0 0.0
        %609 = vmatpush1.msra.mxu0 0.0
        %610 = vmatprep.subr.mxu0 0.0
        %611 = vmatpush1.msra.mxu0 0.0
        %612 = vmatprep.subr.mxu0 0.0
        %613 = vmatpush1.msra.mxu0 0.0
        %614 = vmatprep.subr.mxu0 0.0
        %615 = vmatpush1.msra.mxu0 0.0
        %616 = vmatprep.subr.mxu0 0.0
        %617 = vmatpush1.msra.mxu0 0.0
        %618 = vmatprep.subr.mxu0 0.0
        %619 = vmatpush1.msra.mxu0 0.0
        %620 = vmatprep.subr.mxu0 0.0
        %621 = vmatpush1.msra.mxu0 0.0
        %622 = vmatprep.subr.mxu0 0.0
        %623 = vmatpush1.msra.mxu0 0.0
        %624 = vmatprep.subr.mxu0 0.0
        %625 = vmatpush1.msra.mxu0 0.0
        %626 = vmatprep.subr.mxu0 0.0
        %627 = vmatpush1.msra.mxu0 0.0
        %628 = vmatprep.subr.mxu0 0.0
        %629 = vmatpush1.msra.mxu0 0.0
        %630 = vmatprep.subr.mxu0 0.0
        %631 = vmatpush1.msra.mxu0 0.0
        %632 = vmatprep.subr.mxu0 0.0
        %633 = vmatpush1.msra.mxu0 0.0
        %634 = vmatprep.subr.mxu0 0.0
        %635 = vmatpush1.msra.mxu0 0.0
        %636 = vmatprep.subr.mxu0 0.0
        %637 = vmatpush1.msra.mxu0 0.0
        %638 = vmatprep.subr.mxu0 0.0
        %639 = vmatpush1.msra.mxu0 0.0
        %640 = vmatprep.subr.mxu0 0.0
        %641 = vmatpush1.msra.mxu0 0.0
        %642 = vmatprep.subr.mxu0 0.0
        %643 = vmatpush1.msra.mxu0 0.0
        %644 = vmatprep.subr.mxu0 0.0
        %645 = vmatpush1.msra.mxu0 0.0
        %646 = vmatprep.subr.mxu0 0.0
        %647 = vmatpush1.msra.mxu0 0.0
        %648 = vmatprep.subr.mxu0 0.0
        %649 = vmatpush1.msra.mxu0 0.0
        %650 = vmatprep.subr.mxu0 0.0
        %651 = vmatpush1.msra.mxu0 0.0
        %652 = vmatprep.subr.mxu0 0.0
        %653 = vmatpush1.msra.mxu0 0.0
        %654 = vmatprep.subr.mxu0 0.0
        %655 = vmatpush1.msra.mxu0 0.0
        %656 = vmatprep.subr.mxu0 0.0
        %657 = vmatpush1.msra.mxu0 0.0
        %658 = vmatprep.subr.mxu0 0.0
        %659 = vmatpush1.msra.mxu0 0.0
        %660 = vmatprep.mubr.f32.mxu0 0.0
        %661 = vmatmul.mubr.f32.gmra.mrb[0].mxu0 %v594
        %v662 = vpop.f32.mrb[0].mxu0
        %v663 = vadd.f32 %v592, %v662
        %v664 = vpop.f32.mrb[0].mxu0
        %665 = vdwg.mxu0
        %v666 = vmul.f32 %v663, 0.5
        %v667 = vmul.f32 %v666, 1.442695
        %v668 = vpow.pop %v667
        %670 = vrot.lane.b32.xlu0 %v668, 2
        %v671 = vpop.permute.xlu0 %670
        %v673 = vmul.f32 %v215, %v671
        %675 = vrot.lane.b32.xlu0 %v673, 124
        %v676 = vpop.permute.xlu0 %675
        %v678 = vadd.f32 %v663, %v676
        %v679 = vld [vmem:[#allocation5 + $0x88] sm:$0x3]
        %v680 = vld [vmem:[#allocation5 + $0x8a] sm:$0x3]
        %v681 = vld [vmem:[#allocation7 + $0xa] sm:$0x1]
        %v682 = vsel %vm225, %v215, 0
        %v685 = vsel %vm228, %v680, 0
        %687 = vmatprep.subr.mxu0 0.0
        %688 = vmatpush1.msra.mxu0 %v685
        %689 = vmatprep.subr.mxu0 0.0
        %690 = vmatpush1.msra.mxu0 0.0
        %691 = vmatprep.subr.mxu0 0.0
        %692 = vmatpush1.msra.mxu0 0.0
        %693 = vmatprep.subr.mxu0 0.0
        %694 = vmatpush1.msra.mxu0 0.0
        %695 = vmatprep.subr.mxu0 0.0
        %696 = vmatpush1.msra.mxu0 0.0
        %697 = vmatprep.subr.mxu0 0.0
        %698 = vmatpush1.msra.mxu0 0.0
        %699 = vmatprep.subr.mxu0 0.0
        %700 = vmatpush1.msra.mxu0 0.0
        %701 = vmatprep.subr.mxu0 0.0
        %702 = vmatpush1.msra.mxu0 0.0
        %703 = vmatprep.subr.mxu0 0.0
        %704 = vmatpush1.msra.mxu0 0.0
        %705 = vmatprep.subr.mxu0 0.0
        %706 = vmatpush1.msra.mxu0 0.0
        %707 = vmatprep.subr.mxu0 0.0
        %708 = vmatpush1.msra.mxu0 0.0
        %709 = vmatprep.subr.mxu0 0.0
        %710 = vmatpush1.msra.mxu0 0.0
        %711 = vmatprep.subr.mxu0 0.0
        %712 = vmatpush1.msra.mxu0 0.0
        %713 = vmatprep.subr.mxu0 0.0
        %714 = vmatpush1.msra.mxu0 0.0
        %715 = vmatprep.subr.mxu0 0.0
        %716 = vmatpush1.msra.mxu0 0.0
        %717 = vmatprep.subr.mxu0 0.0
        %718 = vmatpush1.msra.mxu0 0.0
        %719 = vmatprep.subr.mxu0 0.0
        %720 = vmatpush1.msra.mxu0 0.0
        %721 = vmatprep.subr.mxu0 0.0
        %722 = vmatpush1.msra.mxu0 0.0
        %723 = vmatprep.subr.mxu0 0.0
        %724 = vmatpush1.msra.mxu0 0.0
        %725 = vmatprep.subr.mxu0 0.0
        %726 = vmatpush1.msra.mxu0 0.0
        %727 = vmatprep.subr.mxu0 0.0
        %728 = vmatpush1.msra.mxu0 0.0
        %729 = vmatprep.subr.mxu0 0.0
        %730 = vmatpush1.msra.mxu0 0.0
        %731 = vmatprep.subr.mxu0 0.0
        %732 = vmatpush1.msra.mxu0 0.0
        %733 = vmatprep.subr.mxu0 0.0
        %734 = vmatpush1.msra.mxu0 0.0
        %735 = vmatprep.subr.mxu0 0.0
        %736 = vmatpush1.msra.mxu0 0.0
        %737 = vmatprep.subr.mxu0 0.0
        %738 = vmatpush1.msra.mxu0 0.0
        %739 = vmatprep.subr.mxu0 0.0
        %740 = vmatpush1.msra.mxu0 0.0
        %741 = vmatprep.subr.mxu0 0.0
        %742 = vmatpush1.msra.mxu0 0.0
        %743 = vmatprep.subr.mxu0 0.0
        %744 = vmatpush1.msra.mxu0 0.0
        %745 = vmatprep.subr.mxu0 0.0
        %746 = vmatpush1.msra.mxu0 0.0
        %747 = vmatprep.subr.mxu0 0.0
        %748 = vmatpush1.msra.mxu0 0.0
        %749 = vmatprep.subr.mxu0 0.0
        %750 = vmatpush1.msra.mxu0 0.0
        %751 = vmatprep.mubr.f32.mxu0 0.0
        %752 = vmatmul.mubr.f32.gmra.mrb[0].mxu0 %v682
        %v753 = vpop.f32.mrb[0].mxu0
        %v754 = vadd.f32 0.0, %v753
        %v755 = vpop.f32.mrb[0].mxu0
        %756 = vdwg.mxu0
        %v758 = vsel %vm225, %v678, 0
        %v761 = vsel %vm228, %v679, 0
        %763 = vmatprep.subr.mxu0 0.0
        %764 = vmatpush1.msra.mxu0 %v761
        %765 = vmatprep.subr.mxu0 0.0
        %766 = vmatpush1.msra.mxu0 0.0
        %767 = vmatprep.subr.mxu0 0.0
        %768 = vmatpush1.msra.mxu0 0.0
        %769 = vmatprep.subr.mxu0 0.0
        %770 = vmatpush1.msra.mxu0 0.0
        %771 = vmatprep.subr.mxu0 0.0
        %772 = vmatpush1.msra.mxu0 0.0
        %773 = vmatprep.subr.mxu0 0.0
        %774 = vmatpush1.msra.mxu0 0.0
        %775 = vmatprep.subr.mxu0 0.0
        %776 = vmatpush1.msra.mxu0 0.0
        %777 = vmatprep.subr.mxu0 0.0
        %778 = vmatpush1.msra.mxu0 0.0
        %779 = vmatprep.subr.mxu0 0.0
        %780 = vmatpush1.msra.mxu0 0.0
        %781 = vmatprep.subr.mxu0 0.0
        %782 = vmatpush1.msra.mxu0 0.0
        %783 = vmatprep.subr.mxu0 0.0
        %784 = vmatpush1.msra.mxu0 0.0
        %785 = vmatprep.subr.mxu0 0.0
        %786 = vmatpush1.msra.mxu0 0.0
        %787 = vmatprep.subr.mxu0 0.0
        %788 = vmatpush1.msra.mxu0 0.0
        %789 = vmatprep.subr.mxu0 0.0
        %790 = vmatpush1.msra.mxu0 0.0
        %791 = vmatprep.subr.mxu0 0.0
        %792 = vmatpush1.msra.mxu0 0.0
        %793 = vmatprep.subr.mxu0 0.0
        %794 = vmatpush1.msra.mxu0 0.0
        %795 = vmatprep.subr.mxu0 0.0
        %796 = vmatpush1.msra.mxu0 0.0
        %797 = vmatprep.subr.mxu0 0.0
        %798 = vmatpush1.msra.mxu0 0.0
        %799 = vmatprep.subr.mxu0 0.0
        %800 = vmatpush1.msra.mxu0 0.0
        %801 = vmatprep.subr.mxu0 0.0
        %802 = vmatpush1.msra.mxu0 0.0
        %803 = vmatprep.subr.mxu0 0.0
        %804 = vmatpush1.msra.mxu0 0.0
        %805 = vmatprep.subr.mxu0 0.0
        %806 = vmatpush1.msra.mxu0 0.0
        %807 = vmatprep.subr.mxu0 0.0
        %808 = vmatpush1.msra.mxu0 0.0
        %809 = vmatprep.subr.mxu0 0.0
        %810 = vmatpush1.msra.mxu0 0.0
        %811 = vmatprep.subr.mxu0 0.0
        %812 = vmatpush1.msra.mxu0 0.0
        %813 = vmatprep.subr.mxu0 0.0
        %814 = vmatpush1.msra.mxu0 0.0
        %815 = vmatprep.subr.mxu0 0.0
        %816 = vmatpush1.msra.mxu0 0.0
        %817 = vmatprep.subr.mxu0 0.0
        %818 = vmatpush1.msra.mxu0 0.0
        %819 = vmatprep.subr.mxu0 0.0
        %820 = vmatpush1.msra.mxu0 0.0
        %821 = vmatprep.subr.mxu0 0.0
        %822 = vmatpush1.msra.mxu0 0.0
        %823 = vmatprep.subr.mxu0 0.0
        %824 = vmatpush1.msra.mxu0 0.0
        %825 = vmatprep.subr.mxu0 0.0
        %826 = vmatpush1.msra.mxu0 0.0
        %827 = vmatprep.mubr.f32.mxu0 0.0
        %828 = vmatmul.mubr.f32.gmra.mrb[0].mxu0 %v758
        %v829 = vpop.f32.mrb[0].mxu0
        %v830 = vadd.f32 %v754, %v829
        %v831 = vpop.f32.mrb[0].mxu0
        %832 = vdwg.mxu0
        %v833 = vlaneseq
        %v834 = vshrl.u32 %v833, 7
        %v835 = vsub.s32 0, %v834
        %v836 = vrot.slane %v681, %v835
        %v837 = vadd.f32 %v830, %v836
        %v838 = vld [vmem:[#allocation7 + $0xb] sm:$0x1]
        %v839 = vld [vmem:[#allocation7 + $0xc] sm:$0x1]
        %v840 = vsel %vm425, %v837, 0.0
        %v841 = vrot.slane %v840, 4
        %v842 = vadd.f32 %v840, %v841
        %v843 = vrot.slane %v842, 2
        %v844 = vadd.f32 %v842, %v843
        %v845 = vrot.slane %v844, 1
        %v846 = vadd.f32 %v844, %v845
        %v847 = vmul.f32 %v846, %v312
        %v848 = vmul.f32 %v837, %v837
        %v849 = vsel %vm425, %v848, 0.0
        %v850 = vrot.slane %v849, 4
        %v851 = vadd.f32 %v849, %v850
        %v852 = vrot.slane %v851, 2
        %v853 = vadd.f32 %v851, %v852
        %v854 = vrot.slane %v853, 1
        %v855 = vadd.f32 %v853, %v854
        %v856 = vmul.f32 %v855, %v312
        %v857 = vmul.f32 %v847, %v847
        %v858 = vsub.f32 %v856, %v857
        %v859 = vsub.f32 %v837, %v847
        %v860 = vlaneseq
        %v861 = vshrl.u32 %v860, 7
        %v862 = vsub.s32 0, %v861
        %v863 = vrot.slane %v838, %v862
        %v864 = vmul.f32 %v863, %v859
        %v865 = vadd.f32 %v858, 1e-05
        %v866 = vrsqrt.pop %v865
        %v867 = vmul.f32 %v864, %v866
        %v868 = vlaneseq
        %v869 = vshrl.u32 %v868, 7
        %v870 = vsub.s32 0, %v869
        %v871 = vrot.slane %v839, %v870
        %v872 = vadd.f32 %v867, %v871
        %v873 = vmul.f32 %v872, 0.2
        %v874 = vmax.f32 %v872, %v873
        %v875 = vld [vmem:[#allocation5 + $0x90] sm:$0xff]
        %v876 = vld [vmem:[#allocation5 + $0x98] sm:$0xff]
        %v877 = vld [vmem:[#allocation5 + $0xa0] sm:$0xff]
        %v878 = vld [vmem:[#allocation5 + $0xa8] sm:$0xff]
        %v879 = vld [vmem:[#allocation5 + $0xb0] sm:$0xff]
        %v880 = vld [vmem:[#allocation5 + $0xb8] sm:$0xff]
        %v881 = vld [vmem:[#allocation5 + $0xc0] sm:$0xff]
        %v882 = vld [vmem:[#allocation5 + $0xc8] sm:$0xff]
        %v883 = vld [vmem:[#allocation7 + $0xd] sm:$0x1]
        %v884 = vlaneseq
        %v885 = vshrl.u32 %v884, 7
        %v886 = vsub.s32 0, %v885
        %v887 = vrot.slane %v883, %v886
        %v889 = vsel %vm425, %v874, 0
        %891 = vmatprep.subr.mxu0 0.0
        %892 = vmatpush1.msra.mxu0 %v875
        %893 = vmatprep.subr.mxu0 0.0
        %894 = vmatpush1.msra.mxu0 %v876
        %895 = vmatprep.subr.mxu0 0.0
        %896 = vmatpush1.msra.mxu0 %v877
        %897 = vmatprep.subr.mxu0 0.0
        %898 = vmatpush1.msra.mxu0 %v878
        %899 = vmatprep.subr.mxu0 0.0
        %900 = vmatpush1.msra.mxu0 %v879
        %901 = vmatprep.subr.mxu0 0.0
        %902 = vmatpush1.msra.mxu0 %v880
        %903 = vmatprep.subr.mxu0 0.0
        %904 = vmatpush1.msra.mxu0 %v881
        %905 = vmatprep.subr.mxu0 0.0
        %906 = vmatpush1.msra.mxu0 %v882
        %907 = vmatprep.subr.mxu0 0.0
        %908 = vmatpush1.msra.mxu0 0.0
        %909 = vmatprep.subr.mxu0 0.0
        %910 = vmatpush1.msra.mxu0 0.0
        %911 = vmatprep.subr.mxu0 0.0
        %912 = vmatpush1.msra.mxu0 0.0
        %913 = vmatprep.subr.mxu0 0.0
        %914 = vmatpush1.msra.mxu0 0.0
        %915 = vmatprep.subr.mxu0 0.0
        %916 = vmatpush1.msra.mxu0 0.0
        %917 = vmatprep.subr.mxu0 0.0
        %918 = vmatpush1.msra.mxu0 0.0
        %919 = vmatprep.subr.mxu0 0.0
        %920 = vmatpush1.msra.mxu0 0.0
        %921 = vmatprep.subr.mxu0 0.0
        %922 = vmatpush1.msra.mxu0 0.0
        %923 = vmatprep.subr.mxu0 0.0
        %924 = vmatpush1.msra.mxu0 0.0
        %925 = vmatprep.subr.mxu0 0.0
        %926 = vmatpush1.msra.mxu0 0.0
        %927 = vmatprep.subr.mxu0 0.0
        %928 = vmatpush1.msra.mxu0 0.0
        %929 = vmatprep.subr.mxu0 0.0
        %930 = vmatpush1.msra.mxu0 0.0
        %931 = vmatprep.subr.mxu0 0.0
        %932 = vmatpush1.msra.mxu0 0.0
        %933 = vmatprep.subr.mxu0 0.0
        %934 = vmatpush1.msra.mxu0 0.0
        %935 = vmatprep.subr.mxu0 0.0
        %936 = vmatpush1.msra.mxu0 0.0
        %937 = vmatprep.subr.mxu0 0.0
        %938 = vmatpush1.msra.mxu0 0.0
        %939 = vmatprep.subr.mxu0 0.0
        %940 = vmatpush1.msra.mxu0 0.0
        %941 = vmatprep.subr.mxu0 0.0
        %942 = vmatpush1.msra.mxu0 0.0
        %943 = vmatprep.subr.mxu0 0.0
        %944 = vmatpush1.msra.mxu0 0.0
        %945 = vmatprep.subr.mxu0 0.0
        %946 = vmatpush1.msra.mxu0 0.0
        %947 = vmatprep.subr.mxu0 0.0
        %948 = vmatpush1.msra.mxu0 0.0
        %949 = vmatprep.subr.mxu0 0.0
        %950 = vmatpush1.msra.mxu0 0.0
        %951 = vmatprep.subr.mxu0 0.0
        %952 = vmatpush1.msra.mxu0 0.0
        %953 = vmatprep.subr.mxu0 0.0
        %954 = vmatpush1.msra.mxu0 0.0
        %955 = vmatprep.mubr.f32.mxu0 0.0
        %956 = vmatmul.mubr.f32.gmra.mrb[0].mxu0 %v889
        %v957 = vpop.f32.mrb[0].mxu0
        %v958 = vadd.f32 %v887, %v957
        %v959 = vpop.f32.mrb[0].mxu0
        %960 = vdwg.mxu0
        %v961 = vld [vmem:[#allocation7 + $0xe] sm:$0x1]
        %v962 = vld [vmem:[#allocation7 + $0xf] sm:$0x1]
        %v963 = vrot.slane %v958, 4
        %v964 = vadd.f32 %v958, %v963
        %v965 = vrot.slane %v964, 2
        %v966 = vadd.f32 %v964, %v965
        %v967 = vrot.slane %v966, 1
        %v968 = vadd.f32 %v966, %v967
        %v969 = vmul.f32 %v968, %v312
        %v970 = vmul.f32 %v958, %v958
        %v971 = vrot.slane %v970, 4
        %v972 = vadd.f32 %v970, %v971
        %v973 = vrot.slane %v972, 2
        %v974 = vadd.f32 %v972, %v973
        %v975 = vrot.slane %v974, 1
        %v976 = vadd.f32 %v974, %v975
        %v977 = vmul.f32 %v976, %v312
        %v978 = vmul.f32 %v969, %v969
        %v979 = vsub.f32 %v977, %v978
        %v980 = vsub.f32 %v958, %v969
        %v981 = vlaneseq
        %v982 = vshrl.u32 %v981, 7
        %v983 = vsub.s32 0, %v982
        %v984 = vrot.slane %v961, %v983
        %v985 = vmul.f32 %v984, %v980
        %v986 = vadd.f32 %v979, 1e-05
        %v987 = vrsqrt.pop %v986
        %v988 = vmul.f32 %v985, %v987
        %v989 = vlaneseq
        %v990 = vshrl.u32 %v989, 7
        %v991 = vsub.s32 0, %v990
        %v992 = vrot.slane %v962, %v991
        %v993 = vadd.f32 %v988, %v992
        %v994 = vmul.f32 %v993, 0.2
        %v995 = vmax.f32 %v993, %v994
        %v996 = vld [vmem:[#allocation5 + $0xd0] sm:$0xff]
        %v997 = vld [vmem:[#allocation5 + $0xd8] sm:$0xff]
        %v998 = vld [vmem:[#allocation5 + $0xe0] sm:$0xff]
        %v999 = vld [vmem:[#allocation5 + $0xe8] sm:$0xff]
        %v1000 = vld [vmem:[#allocation5 + $0xf0] sm:$0xff]
        %v1001 = vld [vmem:[#allocation5 + $0xf8] sm:$0xff]
        %v1002 = vld [vmem:[#allocation5 + $0x100] sm:$0xff]
        %v1003 = vld [vmem:[#allocation5 + $0x108] sm:$0xff]
        %v1004 = vld [vmem:[#allocation5 + $0x110] sm:$0xff]
        %v1005 = vld [vmem:[#allocation5 + $0x118] sm:$0xff]
        %v1006 = vld [vmem:[#allocation5 + $0x120] sm:$0xff]
        %v1007 = vld [vmem:[#allocation5 + $0x128] sm:$0xff]
        %v1008 = vld [vmem:[#allocation5 + $0x130] sm:$0xff]
        %v1009 = vld [vmem:[#allocation5 + $0x138] sm:$0xff]
        %v1010 = vld [vmem:[#allocation5 + $0x140] sm:$0xff]
        %v1011 = vld [vmem:[#allocation5 + $0x148] sm:$0xff]
        %v1012 = vld [vmem:[#allocation7 + $0x10] sm:$0x1]
        %v1013 = vlaneseq
        %v1014 = vshrl.u32 %v1013, 7
        %v1015 = vsub.s32 0, %v1014
        %v1016 = vrot.slane %v1012, %v1015
        %1017 = vmatprep.subr.mxu0 0.0
        %1018 = vmatpush1.msra.mxu0 %v996
        %1019 = vmatprep.subr.mxu0 0.0
        %1020 = vmatpush1.msra.mxu0 %v997
        %1021 = vmatprep.subr.mxu0 0.0
        %1022 = vmatpush1.msra.mxu0 %v998
        %1023 = vmatprep.subr.mxu0 0.0
        %1024 = vmatpush1.msra.mxu0 %v999
        %1025 = vmatprep.subr.mxu0 0.0
        %1026 = vmatpush1.msra.mxu0 %v1000
        %1027 = vmatprep.subr.mxu0 0.0
        %1028 = vmatpush1.msra.mxu0 %v1001
        %1029 = vmatprep.subr.mxu0 0.0
        %1030 = vmatpush1.msra.mxu0 %v1002
        %1031 = vmatprep.subr.mxu0 0.0
        %1032 = vmatpush1.msra.mxu0 %v1003
        %1033 = vmatprep.subr.mxu0 0.0
        %1034 = vmatpush1.msra.mxu0 %v1004
        %1035 = vmatprep.subr.mxu0 0.0
        %1036 = vmatpush1.msra.mxu0 %v1005
        %1037 = vmatprep.subr.mxu0 0.0
        %1038 = vmatpush1.msra.mxu0 %v1006
        %1039 = vmatprep.subr.mxu0 0.0
        %1040 = vmatpush1.msra.mxu0 %v1007
        %1041 = vmatprep.subr.mxu0 0.0
        %1042 = vmatpush1.msra.mxu0 %v1008
        %1043 = vmatprep.subr.mxu0 0.0
        %1044 = vmatpush1.msra.mxu0 %v1009
        %1045 = vmatprep.subr.mxu0 0.0
        %1046 = vmatpush1.msra.mxu0 %v1010
        %1047 = vmatprep.subr.mxu0 0.0
        %1048 = vmatpush1.msra.mxu0 %v1011
        %1049 = vmatprep.subr.mxu0 0.0
        %1050 = vmatpush1.msra.mxu0 0.0
        %1051 = vmatprep.subr.mxu0 0.0
        %1052 = vmatpush1.msra.mxu0 0.0
        %1053 = vmatprep.subr.mxu0 0.0
        %1054 = vmatpush1.msra.mxu0 0.0
        %1055 = vmatprep.subr.mxu0 0.0
        %1056 = vmatpush1.msra.mxu0 0.0
        %1057 = vmatprep.subr.mxu0 0.0
        %1058 = vmatpush1.msra.mxu0 0.0
        %1059 = vmatprep.subr.mxu0 0.0
        %1060 = vmatpush1.msra.mxu0 0.0
        %1061 = vmatprep.subr.mxu0 0.0
        %1062 = vmatpush1.msra.mxu0 0.0
        %1063 = vmatprep.subr.mxu0 0.0
        %1064 = vmatpush1.msra.mxu0 0.0
        %1065 = vmatprep.subr.mxu0 0.0
        %1066 = vmatpush1.msra.mxu0 0.0
        %1067 = vmatprep.subr.mxu0 0.0
        %1068 = vmatpush1.msra.mxu0 0.0
        %1069 = vmatprep.subr.mxu0 0.0
        %1070 = vmatpush1.msra.mxu0 0.0
        %1071 = vmatprep.subr.mxu0 0.0
        %1072 = vmatpush1.msra.mxu0 0.0
        %1073 = vmatprep.subr.mxu0 0.0
        %1074 = vmatpush1.msra.mxu0 0.0
        %1075 = vmatprep.subr.mxu0 0.0
        %1076 = vmatpush1.msra.mxu0 0.0
        %1077 = vmatprep.subr.mxu0 0.0
        %1078 = vmatpush1.msra.mxu0 0.0
        %1079 = vmatprep.subr.mxu0 0.0
        %1080 = vmatpush1.msra.mxu0 0.0
        %1081 = vmatprep.mubr.f32.mxu0 0.0
        %1082 = vmatmul.mubr.f32.gmra.mrb[0].mxu0 %v995
        %v1083 = vpop.f32.mrb[0].mxu0
        %v1084 = vadd.f32 %v1016, %v1083
        %v1085 = vpop.f32.mrb[0].mxu0
        %1086 = vdwg.mxu0
        %v1087 = vld [vmem:[#allocation7 + $0x11] sm:$0x1]
        %v1088 = vld [vmem:[#allocation7 + $0x12] sm:$0x1]
        %v1089 = vsel %vm425, %v1084, 0.0
        %v1090 = vrot.slane %v1089, 4
        %v1091 = vadd.f32 %v1089, %v1090
        %v1092 = vrot.slane %v1091, 2
        %v1093 = vadd.f32 %v1091, %v1092
        %v1094 = vrot.slane %v1093, 1
        %v1095 = vadd.f32 %v1093, %v1094
        %v1096 = vmul.f32 %v1095, %v312
        %v1097 = vmul.f32 %v1084, %v1084
        %v1098 = vsel %vm425, %v1097, 0.0
        %v1099 = vrot.slane %v1098, 4
        %v1100 = vadd.f32 %v1098, %v1099
        %v1101 = vrot.slane %v1100, 2
        %v1102 = vadd.f32 %v1100, %v1101
        %v1103 = vrot.slane %v1102, 1
        %v1104 = vadd.f32 %v1102, %v1103
        %v1105 = vmul.f32 %v1104, %v312
        %v1106 = vmul.f32 %v1096, %v1096
        %v1107 = vsub.f32 %v1105, %v1106
        %v1108 = vsub.f32 %v1084, %v1096
        %v1109 = vlaneseq
        %v1110 = vshrl.u32 %v1109, 7
        %v1111 = vsub.s32 0, %v1110
        %v1112 = vrot.slane %v1087, %v1111
        %v1113 = vmul.f32 %v1112, %v1108
        %v1114 = vadd.f32 %v1107, 1e-05
        %v1115 = vrsqrt.pop %v1114
        %v1116 = vmul.f32 %v1113, %v1115
        %v1117 = vlaneseq
        %v1118 = vshrl.u32 %v1117, 7
        %v1119 = vsub.s32 0, %v1118
        %v1120 = vrot.slane %v1088, %v1119
        %v1121 = vadd.f32 %v1116, %v1120
        %v1122 = vmul.f32 %v1121, 0.2
        %v1123 = vmax.f32 %v1121, %v1122
        %v1124 = vld [vmem:[#allocation5 + $0x150] sm:$0xff]
        %v1125 = vld [vmem:[#allocation5 + $0x158] sm:$0xff]
        %v1126 = vld [vmem:[#allocation5 + $0x160] sm:$0xff]
        %v1127 = vld [vmem:[#allocation5 + $0x168] sm:$0xff]
        %v1128 = vld [vmem:[#allocation5 + $0x170] sm:$0xff]
        %v1129 = vld [vmem:[#allocation5 + $0x178] sm:$0xff]
        %v1130 = vld [vmem:[#allocation5 + $0x180] sm:$0xff]
        %v1131 = vld [vmem:[#allocation5 + $0x188] sm:$0xff]
        %v1132 = vld [vmem:[#allocation7 + $0x13] sm:$0x1]
        %v1133 = vlaneseq
        %v1134 = vshrl.u32 %v1133, 7
        %v1135 = vsub.s32 0, %v1134
        %v1136 = vrot.slane %v1132, %v1135
        %v1138 = vsel %vm425, %v1123, 0
        %1140 = vmatprep.subr.mxu0 0.0
        %1141 = vmatpush1.msra.mxu0 %v1124
        %1142 = vmatprep.subr.mxu0 0.0
        %1143 = vmatpush1.msra.mxu0 %v1125
        %1144 = vmatprep.subr.mxu0 0.0
        %1145 = vmatpush1.msra.mxu0 %v1126
        %1146 = vmatprep.subr.mxu0 0.0
        %1147 = vmatpush1.msra.mxu0 %v1127
        %1148 = vmatprep.subr.mxu0 0.0
        %1149 = vmatpush1.msra.mxu0 %v1128
        %1150 = vmatprep.subr.mxu0 0.0
        %1151 = vmatpush1.msra.mxu0 %v1129
        %1152 = vmatprep.subr.mxu0 0.0
        %1153 = vmatpush1.msra.mxu0 %v1130
        %1154 = vmatprep.subr.mxu0 0.0
        %1155 = vmatpush1.msra.mxu0 %v1131
        %1156 = vmatprep.subr.mxu0 0.0
        %1157 = vmatpush1.msra.mxu0 0.0
        %1158 = vmatprep.subr.mxu0 0.0
        %1159 = vmatpush1.msra.mxu0 0.0
        %1160 = vmatprep.subr.mxu0 0.0
        %1161 = vmatpush1.msra.mxu0 0.0
        %1162 = vmatprep.subr.mxu0 0.0
        %1163 = vmatpush1.msra.mxu0 0.0
        %1164 = vmatprep.subr.mxu0 0.0
        %1165 = vmatpush1.msra.mxu0 0.0
        %1166 = vmatprep.subr.mxu0 0.0
        %1167 = vmatpush1.msra.mxu0 0.0
        %1168 = vmatprep.subr.mxu0 0.0
        %1169 = vmatpush1.msra.mxu0 0.0
        %1170 = vmatprep.subr.mxu0 0.0
        %1171 = vmatpush1.msra.mxu0 0.0
        %1172 = vmatprep.subr.mxu0 0.0
        %1173 = vmatpush1.msra.mxu0 0.0
        %1174 = vmatprep.subr.mxu0 0.0
        %1175 = vmatpush1.msra.mxu0 0.0
        %1176 = vmatprep.subr.mxu0 0.0
        %1177 = vmatpush1.msra.mxu0 0.0
        %1178 = vmatprep.subr.mxu0 0.0
        %1179 = vmatpush1.msra.mxu0 0.0
        %1180 = vmatprep.subr.mxu0 0.0
        %1181 = vmatpush1.msra.mxu0 0.0
        %1182 = vmatprep.subr.mxu0 0.0
        %1183 = vmatpush1.msra.mxu0 0.0
        %1184 = vmatprep.subr.mxu0 0.0
        %1185 = vmatpush1.msra.mxu0 0.0
        %1186 = vmatprep.subr.mxu0 0.0
        %1187 = vmatpush1.msra.mxu0 0.0
        %1188 = vmatprep.subr.mxu0 0.0
        %1189 = vmatpush1.msra.mxu0 0.0
        %1190 = vmatprep.subr.mxu0 0.0
        %1191 = vmatpush1.msra.mxu0 0.0
        %1192 = vmatprep.subr.mxu0 0.0
        %1193 = vmatpush1.msra.mxu0 0.0
        %1194 = vmatprep.subr.mxu0 0.0
        %1195 = vmatpush1.msra.mxu0 0.0
        %1196 = vmatprep.subr.mxu0 0.0
        %1197 = vmatpush1.msra.mxu0 0.0
        %1198 = vmatprep.subr.mxu0 0.0
        %1199 = vmatpush1.msra.mxu0 0.0
        %1200 = vmatprep.subr.mxu0 0.0
        %1201 = vmatpush1.msra.mxu0 0.0
        %1202 = vmatprep.subr.mxu0 0.0
        %1203 = vmatpush1.msra.mxu0 0.0
        %1204 = vmatprep.mubr.f32.mxu0 0.0
        %1205 = vmatmul.mubr.f32.gmra.mrb[0].mxu0 %v1138
        %v1206 = vpop.f32.mrb[0].mxu0
        %v1207 = vadd.f32 %v1136, %v1206
        %v1208 = vpop.f32.mrb[0].mxu0
        %1209 = vdwg.mxu0
        %1211 = vrot.lane.b32.xlu0 %v1207, 2
        %v1212 = vpop.permute.xlu0 %1211
        %v1214 = vsel %vm225, %v678, %v1212
        %vm1215 = vcmask 64512
        %1216 = vst.msk [vmem:[%s214] sm:$0xff] %vm1215, %v1214
        %s1217 = sand.u32 %s97, 1
        %s1218 = scalar_lea.sflag [#allocation4], %s1217
        %s1219 = sand.u32 %s97, 1
        %s1220 = smul.addr %s1219, 8
        %s1221 = scalar_lea.vmem [#allocation8], %s1220
        // Predicated region
        $region45: #{tpu_custom_call.1} parent=31 // pred_check
          %p1222 = pneg %p107
        $region46: #{tpu_custom_call.1} parent=31 // pred_check_branch
          %1224 = sbr.rel (%p1222) target = $region48
        $region47: #{tpu_custom_call.1} parent=31 // pred_region
          %s1226 = ssub.s32 128, 128
          %1227 = vsyncadd %s1218, %s1226
          %s1228 = smul.addr %s21, 128
          %s1229 = scalar_lea.hbm %s3, %s1228
          %s1231 = sshll.u32 %s1221, 4
          %s1232 = int_to_ptr.vmem [resolvable:$true] %s1231
          %1234 = dma.vmem_to_hbm [thread:$0]  %s1232, 128, %s1229, %s1218
        $region48: #{tpu_custom_call.1} parent=31 // pred_fallthru
          _
      $region32: #{tpu_custom_call.1} parent=5 // pred_fallthru
        _
      %p1235 = scmp.le.s32.totalorder 2, %s16
      // Predicated region
      $region49: #{tpu_custom_call.1} parent=5 // pred_check
        %p1236 = pneg %p1235
      $region50: #{tpu_custom_call.1} parent=5 // pred_check_branch
        %1238 = sbr.rel (%p1236) target = $region52
      $region51: #{tpu_custom_call.1} parent=5 // pred_region
        %s1239 = ssub.s32 %s16, 2
        // Predicated region
        $region53: #{tpu_custom_call.1} parent=51 // pred_check
          %p1240 = pneg %p113
        $region54: #{tpu_custom_call.1} parent=51 // pred_check_branch
          %1242 = sbr.rel (%p1240) target = $region56
        $region55: #{tpu_custom_call.1} parent=51 // pred_region
          %s1243 = sand.u32 %s98, 1
          %s1244 = scalar_lea.sflag [#allocation4], %s1243
          %s1245 = sand.u32 %s98, 1
          %s1246 = smul.addr %s1245, 8
          %s1247 = scalar_lea.vmem [#allocation8], %s1246
          %1248 = dma.done %s1244, 128
        $region56: #{tpu_custom_call.1} parent=51 // pred_fallthru
          _
      $region52: #{tpu_custom_call.1} parent=5 // pred_fallthru
        _
    $region6: #{tpu_custom_call.1} parent=1 // loop_footer
      %s20 = sadd.s32 1, %s16
    $region7: #{tpu_custom_call.1} parent=1 // loop_footer_branch
      %15 = sbr.rel target = $region3
    $region8: #{tpu_custom_call.1} parent=1 // loop_exit
      _
    %1249 = vsyncpa [#allocation3], 1
    %s1250 = scalar_lea.sflag [#allocation3], 1
    %1251 = vsyncpa %s1250, 1
    %1252 = vsyncpa [#allocation6], 1
    %1253 = vsyncpa [#allocation4], 1
    %s1254 = scalar_lea.sflag [#allocation4], 1
    %1255 = vsyncpa %s1254, 1

</llo_original>
